<compile_context>
chip_gen: v7x
topology: tpu7x:2x2x1
jax: 0.10.0
libtpu: 0.0.40
codegen_flags: <defaults>
</compile_context>

<pallas_src>
import jax
import jax.numpy as jnp
from jax import lax
from jax.experimental import pallas as pl
from jax.experimental.pallas import tpu as pltpu

# Small, self-consistent shapes (dim_model must be divisible by num_heads).
BATCH = 2
SEQ = 8
DIM_MODEL = 32
NUM_HEADS = 4
DIM_HEAD = DIM_MODEL // NUM_HEADS
DIM_FFN = 64
BS_TOTAL = BATCH * SEQ      # 16 rows, all batches folded into the sublane dim
EPS = 1e-5                  # torch.nn.LayerNorm default
NEG_BIG = -1e30             # additive mask value (finite -> no inf-inf NaN hazard)
INV_SQRT2 = 0.7071067811865476

# ----- packed parameter slab layout (f32, 128 lanes wide) -----
#   rows   0: 32  cols  0: 96   wqkv  (32, 96)  [Q cols pre-scaled by 1/sqrt(Dh)]
#   rows   0: 32  cols 96:128   wo    (32, 32)
#   rows  32: 64  cols  0: 64   w1    (32, 64)
#   rows  32: 48  cols 64: 80   attention bias (16, 16), block-diagonal over batch
#   rows  64:128  cols  0: 32   w2    (64, 32)
#   row  128      cols  0:128   ln1_g | ln1_b | ln2_g | ln2_b    (4 x 32)
#   row  129      cols  0:128   bqkv (96) | bo (32)
#   row  130      cols  0: 96   b1 (64) | b2 (32)
VEC_ROW = 128
P_ROWS = 136                # 131 used, padded to a multiple of 8


def _layernorm(x, gamma, beta):
    mean = jnp.mean(x, axis=-1, keepdims=True)
    var = jnp.mean((x - mean) ** 2, axis=-1, keepdims=True)  # biased, like torch.nn.LayerNorm
    return (x - mean) * lax.rsqrt(var + EPS) * gamma + beta


def encoder_layer_kernel(x_ref, p_ref, out_ref):
    x = x_ref[...]                                            # (BS, D)

    # --- carve the packed parameter slab (static slices of one VMEM-resident input) ---
    wqkv = p_ref[0:DIM_MODEL, 0:3 * DIM_MODEL]                # (32, 96)
    wo   = p_ref[0:DIM_MODEL, 3 * DIM_MODEL:4 * DIM_MODEL]    # (32, 32)
    w1   = p_ref[DIM_MODEL:2 * DIM_MODEL, 0:DIM_FFN]          # (32, 64)
    bias = p_ref[DIM_MODEL:DIM_MODEL + BS_TOTAL,
                 DIM_FFN:DIM_FFN + BS_TOTAL]                  # (16, 16) additive attn bias
    w2   = p_ref[2 * DIM_MODEL:2 * DIM_MODEL + DIM_FFN, 0:DIM_MODEL]   # (64, 32)
    vecs = p_ref[VEC_ROW:VEC_ROW + 3, :]                      # (3, 128) all 1-D params
    ln1_g = vecs[0:1, 0:32]
    ln1_b = vecs[0:1, 32:64]
    ln2_g = vecs[0:1, 64:96]
    ln2_b = vecs[0:1, 96:128]
    bqkv = vecs[1:2, 0:96]
    bo   = vecs[1:2, 96:128]
    b1   = vecs[2:3, 0:DIM_FFN]
    b2   = vecs[2:3, DIM_FFN:DIM_FFN + DIM_MODEL]

    # --- pre-LN 1 ---
    h = _layernorm(x, ln1_g, ln1_b)                           # (BS, D)

    # --- fused QKV projection: one depth-32 matmul, 96-lane output (q already scaled) ---
    qkv = jnp.dot(h, wqkv, preferred_element_type=jnp.float32) + bqkv   # (BS, 96)

    # --- scaled dot-product attention; per-head pushes kept back-to-back ---
    scores = []
    for hd in range(NUM_HEADS):
        qh = qkv[:, hd * DIM_HEAD:(hd + 1) * DIM_HEAD]                      # (BS, Dh)
        kh = qkv[:, DIM_MODEL + hd * DIM_HEAD:DIM_MODEL + (hd + 1) * DIM_HEAD]
        s = lax.dot_general(qh, kh, (((1,), (1,)), ((), ())),               # q @ k^T
                            preferred_element_type=jnp.float32) + bias      # (BS, BS)
        scores.append(s)

    probs = []
    for s in scores:
        s = s - jnp.max(s, axis=-1, keepdims=True)
        e = jnp.exp(s)
        probs.append(e * pl.reciprocal(jnp.sum(e, axis=-1, keepdims=True), approx=True))

    ctx_heads = []
    for hd in range(NUM_HEADS):
        vh = qkv[:, 2 * DIM_MODEL + hd * DIM_HEAD:2 * DIM_MODEL + (hd + 1) * DIM_HEAD]
        ctx_heads.append(jnp.dot(probs[hd], vh, preferred_element_type=jnp.float32))

    # --- head concat + output projection: single depth-32 matmul (head-sum on MXU acc) ---
    ctx = jnp.concatenate(ctx_heads, axis=-1)                               # (BS, D)
    attn = jnp.dot(ctx, wo, preferred_element_type=jnp.float32) + bo

    residual = attn + x                                                     # dropout = identity

    # --- pre-LN 2 + FFN + residual ---
    h2 = _layernorm(residual, ln2_g, ln2_b)
    f = jnp.dot(h2, w1, preferred_element_type=jnp.float32) + b1
    f = 0.5 * f * (1.0 + lax.erf(f * INV_SQRT2))                            # exact GELU
    f = jnp.dot(f, w2, preferred_element_type=jnp.float32) + b2

    out_ref[...] = f + residual                                             # single fused store


# ------------------------- wrapper-side preprocessing -------------------------

def _build_attn_bias(mask):
    """(B, S, S) keep/mask -> (B*S, B*S) additive bias, block-diagonal over batch."""
    B, S, _ = mask.shape
    per_batch = jnp.where(mask == 0, jnp.float32(NEG_BIG), jnp.float32(0.0))   # (B, S, S)
    same_batch = jnp.eye(B, dtype=bool)[:, None, :, None]                      # (B, 1, B, 1)
    bias4 = jnp.where(same_batch, per_batch[:, :, None, :], jnp.float32(NEG_BIG))
    return bias4.reshape(B * S, B * S)


def _pack_param_slab(params, mask):
    """Pack every parameter + the attention bias into one (P_ROWS, 128) f32 slab."""
    (ln1_g, ln1_b, wq, bq, wk, bk, wv, bv, wo, bo,
     ln2_g, ln2_b, w1, b1, w2, b2) = params
    inv_scale = 1.0 / jnp.sqrt(jnp.float32(DIM_HEAD))
    wqkv = jnp.concatenate([wq * inv_scale, wk, wv], axis=-1)       # (32, 96)
    bqkv = jnp.concatenate([bq * inv_scale, bk, bv], axis=-1)       # (1, 96)
    bias = _build_attn_bias(mask)                                   # (16, 16)

    slab = jnp.zeros((P_ROWS, 128), jnp.float32)
    slab = slab.at[0:DIM_MODEL, 0:3 * DIM_MODEL].set(wqkv)
    slab = slab.at[0:DIM_MODEL, 3 * DIM_MODEL:4 * DIM_MODEL].set(wo)
    slab = slab.at[DIM_MODEL:2 * DIM_MODEL, 0:DIM_FFN].set(w1)
    slab = slab.at[DIM_MODEL:DIM_MODEL + BS_TOTAL,
                   DIM_FFN:DIM_FFN + BS_TOTAL].set(bias)
    slab = slab.at[2 * DIM_MODEL:2 * DIM_MODEL + DIM_FFN, 0:DIM_MODEL].set(w2)
    slab = slab.at[VEC_ROW, 0:32].set(ln1_g[0])
    slab = slab.at[VEC_ROW, 32:64].set(ln1_b[0])
    slab = slab.at[VEC_ROW, 64:96].set(ln2_g[0])
    slab = slab.at[VEC_ROW, 96:128].set(ln2_b[0])
    slab = slab.at[VEC_ROW + 1, 0:96].set(bqkv[0])
    slab = slab.at[VEC_ROW + 1, 96:128].set(bo[0])
    slab = slab.at[VEC_ROW + 2, 0:DIM_FFN].set(b1[0])
    slab = slab.at[VEC_ROW + 2, DIM_FFN:DIM_FFN + DIM_MODEL].set(b2[0])
    return slab


def encoder_layer_pallas(x, mask, params):
    B, S, D = x.shape
    x2d = x.reshape(B * S, D)
    slab = _pack_param_slab(params, mask)

    out2d = pl.pallas_call(
        encoder_layer_kernel,
        out_shape=jax.ShapeDtypeStruct((B * S, D), jnp.float32),
        grid=(1,),                       # one block of work -> one step (see v7x TODO above)
        in_specs=[pl.BlockSpec((B * S, D), lambda i: (0, 0)),
                  pl.BlockSpec((P_ROWS, 128), lambda i: (0, 0))],
        out_specs=pl.BlockSpec((B * S, D), lambda i: (0, 0)),
        compiler_params=pltpu.CompilerParams(dimension_semantics=("arbitrary",)),
    )(x2d, slab)
    return out2d.reshape(B, S, D)


# ------------------------------ JAX reference ------------------------------

def encoder_layer_ref(x, mask, params):
    (ln1_g, ln1_b, wq, bq, wk, bk, wv, bv, wo, bo,
     ln2_g, ln2_b, w1, b1, w2, b2) = params

    def ln(z, g, b):
        mean = jnp.mean(z, axis=-1, keepdims=True)
        var = jnp.mean((z - mean) ** 2, axis=-1, keepdims=True)
        return (z - mean) / jnp.sqrt(var + EPS) * g + b

    h = ln(x, ln1_g, ln1_b)
    q = h @ wq + bq
    k = h @ wk + bk
    v = h @ wv + bv
    outs = []
    for hi in range(NUM_HEADS):
        sl = slice(hi * DIM_HEAD, (hi + 1) * DIM_HEAD)
        qh, kh, vh = q[..., sl], k[..., sl], v[..., sl]
        s = jnp.einsum("bqd,bkd->bqk", qh, kh) / jnp.sqrt(jnp.float32(DIM_HEAD))
        s = jnp.where(mask == 0, -jnp.inf, s)
        p = jax.nn.softmax(s, axis=-1)
        outs.append(jnp.einsum("bqk,bkd->bqd", p, vh))
    attn = jnp.concatenate(outs, axis=-1) @ wo + bo
    residual = attn + x
    h2 = ln(residual, ln2_g, ln2_b)
    f = h2 @ w1 + b1
    f = 0.5 * f * (1.0 + lax.erf(f / jnp.sqrt(jnp.float32(2.0))))
    f = f @ w2 + b2
    return f + residual


def make_params(key):
    ks = jax.random.split(key, 8)
    scale = 0.05
    ln1_g = jnp.ones((1, DIM_MODEL), jnp.float32)
    ln1_b = jnp.zeros((1, DIM_MODEL), jnp.float32)
    wq = scale * jax.random.normal(ks[0], (DIM_MODEL, DIM_MODEL), jnp.float32)
    bq = scale * jax.random.normal(ks[1], (1, DIM_MODEL), jnp.float32)
    wk = scale * jax.random.normal(ks[2], (DIM_MODEL, DIM_MODEL), jnp.float32)
    bk = scale * jax.random.normal(ks[3], (1, DIM_MODEL), jnp.float32)
    wv = scale * jax.random.normal(ks[4], (DIM_MODEL, DIM_MODEL), jnp.float32)
    bv = scale * jax.random.normal(ks[5], (1, DIM_MODEL), jnp.float32)
    wo = scale * jax.random.normal(ks[6], (DIM_MODEL, DIM_MODEL), jnp.float32)
    bo = jnp.zeros((1, DIM_MODEL), jnp.float32)
    ln2_g = jnp.ones((1, DIM_MODEL), jnp.float32)
    ln2_b = jnp.zeros((1, DIM_MODEL), jnp.float32)
    kf = jax.random.split(ks[7], 4)
    w1 = scale * jax.random.normal(kf[0], (DIM_MODEL, DIM_FFN), jnp.float32)
    b1 = scale * jax.random.normal(kf[1], (1, DIM_FFN), jnp.float32)
    w2 = scale * jax.random.normal(kf[2], (DIM_FFN, DIM_MODEL), jnp.float32)
    b2 = scale * jax.random.normal(kf[3], (1, DIM_MODEL), jnp.float32)
    return (ln1_g, ln1_b, wq, bq, wk, bk, wv, bv, wo, bo,
            ln2_g, ln2_b, w1, b1, w2, b2)


if __name__ == "__main__":
    key = jax.random.PRNGKey(0)
    kx, kp = jax.random.split(key)
    x = jax.random.normal(kx, (BATCH, SEQ, DIM_MODEL), jnp.float32)
    # Padding-style mask: batch 1 has its last key position masked out.
    mask = jnp.ones((BATCH, SEQ, SEQ), jnp.float32)
    mask = mask.at[1, :, -1].set(0.0)
    params = make_params(kp)

    out = encoder_layer_pallas(x, mask, params)
    out = jax.block_until_ready(out)

    ref = encoder_layer_ref(x, mask, params)
    assert out.shape == (BATCH, SEQ, DIM_MODEL)
    # Tolerance slightly relaxed vs exact f32 because the kernel uses the EUP
    # approximate reciprocal for the softmax normalization (per perf review).
    assert jnp.allclose(out, ref, rtol=2e-3, atol=2e-3), "mismatch vs JAX reference"
    print("KERNEL_OK")
</pallas_src>

<mosaic_0001>
module attributes {stable_mosaic.version = 11 : i64} {
  func.func @encoder_layer_kernel(%arg0: i32, %arg1: memref<16x32xf32, #tpu.memory_space<vmem>>, %arg2: memref<136x128xf32, #tpu.memory_space<vmem>>, %arg3: memref<16x32xf32, #tpu.memory_space<vmem>>) attributes {dimension_semantics = [#tpu.dimension_semantics<arbitrary>], iteration_bounds = array<i64: 1>, scalar_prefetch = 0 : i64, scratch_operands = 0 : i64, tpu.core_type = #tpu.core_type<tc>, window_params = [{pipeline_mode = #tpu.pipeline_mode<synchronous>, transform_indices = @transform_0, window_bounds = array<i64: 16, 32>}, {pipeline_mode = #tpu.pipeline_mode<synchronous>, transform_indices = @transform_1, window_bounds = array<i64: 136, 128>}, {pipeline_mode = #tpu.pipeline_mode<synchronous>, transform_indices = @transform_2, window_bounds = array<i64: 16, 32>}]} {
    %c0 = arith.constant 0 : index
    %c0_0 = arith.constant 0 : index
    %0 = vector.load %arg1[%c0, %c0_0] : memref<16x32xf32, #tpu.memory_space<vmem>>, vector<16x32xf32>
    %c0_1 = arith.constant 0 : index
    %c0_2 = arith.constant 0 : index
    %1 = vector.load %arg2[%c0_1, %c0_2] : memref<136x128xf32, #tpu.memory_space<vmem>>, vector<32x96xf32>
    %c0_3 = arith.constant 0 : index
    %c96 = arith.constant 96 : index
    %2 = vector.load %arg2[%c0_3, %c96] : memref<136x128xf32, #tpu.memory_space<vmem>>, vector<32x32xf32>
    %c32 = arith.constant 32 : index
    %c0_4 = arith.constant 0 : index
    %3 = vector.load %arg2[%c32, %c0_4] : memref<136x128xf32, #tpu.memory_space<vmem>>, vector<32x64xf32>
    %c32_5 = arith.constant 32 : index
    %c64 = arith.constant 64 : index
    %4 = vector.load %arg2[%c32_5, %c64] : memref<136x128xf32, #tpu.memory_space<vmem>>, vector<16x16xf32>
    %c64_6 = arith.constant 64 : index
    %c0_7 = arith.constant 0 : index
    %5 = vector.load %arg2[%c64_6, %c0_7] : memref<136x128xf32, #tpu.memory_space<vmem>>, vector<64x32xf32>
    %c128 = arith.constant 128 : index
    %c0_8 = arith.constant 0 : index
    %6 = vector.load %arg2[%c128, %c0_8] : memref<136x128xf32, #tpu.memory_space<vmem>>, vector<3x128xf32>
    %7 = vector.extract_strided_slice %6 {offsets = [0, 0], sizes = [1, 32], strides = [1, 1]} : vector<3x128xf32> to vector<1x32xf32>
    %8 = vector.extract_strided_slice %6 {offsets = [0, 32], sizes = [1, 32], strides = [1, 1]} : vector<3x128xf32> to vector<1x32xf32>
    %9 = vector.extract_strided_slice %6 {offsets = [0, 64], sizes = [1, 32], strides = [1, 1]} : vector<3x128xf32> to vector<1x32xf32>
    %10 = vector.extract_strided_slice %6 {offsets = [0, 96], sizes = [1, 32], strides = [1, 1]} : vector<3x128xf32> to vector<1x32xf32>
    %11 = vector.extract_strided_slice %6 {offsets = [1, 0], sizes = [1, 96], strides = [1, 1]} : vector<3x128xf32> to vector<1x96xf32>
    %12 = vector.extract_strided_slice %6 {offsets = [1, 96], sizes = [1, 32], strides = [1, 1]} : vector<3x128xf32> to vector<1x32xf32>
    %13 = vector.extract_strided_slice %6 {offsets = [2, 0], sizes = [1, 64], strides = [1, 1]} : vector<3x128xf32> to vector<1x64xf32>
    %14 = vector.extract_strided_slice %6 {offsets = [2, 64], sizes = [1, 32], strides = [1, 1]} : vector<3x128xf32> to vector<1x32xf32>
    %cst = arith.constant dense<0.000000e+00> : vector<16xf32>
    %15 = vector.multi_reduction <add>, %0, %cst [1] : vector<16x32xf32> to vector<16xf32>
    %16 = vector.shape_cast %15 : vector<16xf32> to vector<16x1xf32>
    %cst_9 = arith.constant 3.200000e+01 : f32
    %17 = vector.broadcast %cst_9 : f32 to vector<16x1xf32>
    %18 = arith.divf %16, %17 : vector<16x1xf32>
    %19 = vector.broadcast %18 : vector<16x1xf32> to vector<16x32xf32>
    %20 = arith.subf %0, %19 : vector<16x32xf32>
    %21 = arith.mulf %20, %20 : vector<16x32xf32>
    %cst_10 = arith.constant dense<0.000000e+00> : vector<16xf32>
    %22 = vector.multi_reduction <add>, %21, %cst_10 [1] : vector<16x32xf32> to vector<16xf32>
    %23 = vector.shape_cast %22 : vector<16xf32> to vector<16x1xf32>
    %cst_11 = arith.constant 3.200000e+01 : f32
    %24 = vector.broadcast %cst_11 : f32 to vector<16x1xf32>
    %25 = arith.divf %23, %24 : vector<16x1xf32>
    %26 = vector.broadcast %18 : vector<16x1xf32> to vector<16x32xf32>
    %27 = arith.subf %0, %26 : vector<16x32xf32>
    %cst_12 = arith.constant 9.99999974E-6 : f32
    %28 = vector.broadcast %cst_12 : f32 to vector<16x1xf32>
    %29 = arith.addf %25, %28 : vector<16x1xf32>
    %30 = math.rsqrt %29 : vector<16x1xf32>
    %31 = vector.broadcast %30 : vector<16x1xf32> to vector<16x32xf32>
    %32 = arith.mulf %27, %31 : vector<16x32xf32>
    %33 = vector.broadcast %7 : vector<1x32xf32> to vector<16x32xf32>
    %34 = arith.mulf %32, %33 : vector<16x32xf32>
    %35 = vector.broadcast %8 : vector<1x32xf32> to vector<16x32xf32>
    %36 = arith.addf %34, %35 : vector<16x32xf32>
    %cst_13 = arith.constant dense<0.000000e+00> : vector<16x96xf32>
    %37 = tpu.matmul %36, %1, %cst_13 {dimension_numbers = #tpu.dot_dimension_numbers<[1], [0], [0], [1], [0, 0, 1, 1], [], []>} : vector<16x32xf32>, vector<32x96xf32>, vector<16x96xf32> -> vector<16x96xf32>
    %38 = vector.broadcast %11 : vector<1x96xf32> to vector<16x96xf32>
    %39 = arith.addf %37, %38 : vector<16x96xf32>
    %40 = vector.extract_strided_slice %39 {offsets = [0, 0], sizes = [16, 8], strides = [1, 1]} : vector<16x96xf32> to vector<16x8xf32>
    %41 = vector.extract_strided_slice %39 {offsets = [0, 32], sizes = [16, 8], strides = [1, 1]} : vector<16x96xf32> to vector<16x8xf32>
    %cst_14 = arith.constant dense<0.000000e+00> : vector<16x16xf32>
    %42 = tpu.matmul %40, %41, %cst_14 {dimension_numbers = #tpu.dot_dimension_numbers<[1], [1], [0], [0], [0, 0, 1, 0], [], []>} : vector<16x8xf32>, vector<16x8xf32>, vector<16x16xf32> -> vector<16x16xf32>
    %43 = arith.addf %42, %4 : vector<16x16xf32>
    %44 = vector.extract_strided_slice %39 {offsets = [0, 8], sizes = [16, 8], strides = [1, 1]} : vector<16x96xf32> to vector<16x8xf32>
    %45 = vector.extract_strided_slice %39 {offsets = [0, 40], sizes = [16, 8], strides = [1, 1]} : vector<16x96xf32> to vector<16x8xf32>
    %cst_15 = arith.constant dense<0.000000e+00> : vector<16x16xf32>
    %46 = tpu.matmul %44, %45, %cst_15 {dimension_numbers = #tpu.dot_dimension_numbers<[1], [1], [0], [0], [0, 0, 1, 0], [], []>} : vector<16x8xf32>, vector<16x8xf32>, vector<16x16xf32> -> vector<16x16xf32>
    %47 = arith.addf %46, %4 : vector<16x16xf32>
    %48 = vector.extract_strided_slice %39 {offsets = [0, 16], sizes = [16, 8], strides = [1, 1]} : vector<16x96xf32> to vector<16x8xf32>
    %49 = vector.extract_strided_slice %39 {offsets = [0, 48], sizes = [16, 8], strides = [1, 1]} : vector<16x96xf32> to vector<16x8xf32>
    %cst_16 = arith.constant dense<0.000000e+00> : vector<16x16xf32>
    %50 = tpu.matmul %48, %49, %cst_16 {dimension_numbers = #tpu.dot_dimension_numbers<[1], [1], [0], [0], [0, 0, 1, 0], [], []>} : vector<16x8xf32>, vector<16x8xf32>, vector<16x16xf32> -> vector<16x16xf32>
    %51 = arith.addf %50, %4 : vector<16x16xf32>
    %52 = vector.extract_strided_slice %39 {offsets = [0, 24], sizes = [16, 8], strides = [1, 1]} : vector<16x96xf32> to vector<16x8xf32>
    %53 = vector.extract_strided_slice %39 {offsets = [0, 56], sizes = [16, 8], strides = [1, 1]} : vector<16x96xf32> to vector<16x8xf32>
    %cst_17 = arith.constant dense<0.000000e+00> : vector<16x16xf32>
    %54 = tpu.matmul %52, %53, %cst_17 {dimension_numbers = #tpu.dot_dimension_numbers<[1], [1], [0], [0], [0, 0, 1, 0], [], []>} : vector<16x8xf32>, vector<16x8xf32>, vector<16x16xf32> -> vector<16x16xf32>
    %55 = arith.addf %54, %4 : vector<16x16xf32>
    %cst_18 = arith.constant dense<0xFF800000> : vector<16xf32>
    %56 = vector.multi_reduction <maximumf>, %43, %cst_18 [1] : vector<16x16xf32> to vector<16xf32>
    %57 = vector.shape_cast %56 : vector<16xf32> to vector<16x1xf32>
    %58 = vector.broadcast %57 : vector<16x1xf32> to vector<16x16xf32>
    %59 = arith.subf %43, %58 : vector<16x16xf32>
    %60 = math.exp %59 : vector<16x16xf32>
    %cst_19 = arith.constant dense<0.000000e+00> : vector<16xf32>
    %61 = vector.multi_reduction <add>, %60, %cst_19 [1] : vector<16x16xf32> to vector<16xf32>
    %62 = vector.shape_cast %61 : vector<16xf32> to vector<16x1xf32>
    %63 = tpu.reciprocal %62 {approx = true} : vector<16x1xf32> -> vector<16x1xf32>
    %64 = vector.broadcast %63 : vector<16x1xf32> to vector<16x16xf32>
    %65 = arith.mulf %60, %64 : vector<16x16xf32>
    %cst_20 = arith.constant dense<0xFF800000> : vector<16xf32>
    %66 = vector.multi_reduction <maximumf>, %47, %cst_20 [1] : vector<16x16xf32> to vector<16xf32>
    %67 = vector.shape_cast %66 : vector<16xf32> to vector<16x1xf32>
    %68 = vector.broadcast %67 : vector<16x1xf32> to vector<16x16xf32>
    %69 = arith.subf %47, %68 : vector<16x16xf32>
    %70 = math.exp %69 : vector<16x16xf32>
    %cst_21 = arith.constant dense<0.000000e+00> : vector<16xf32>
    %71 = vector.multi_reduction <add>, %70, %cst_21 [1] : vector<16x16xf32> to vector<16xf32>
    %72 = vector.shape_cast %71 : vector<16xf32> to vector<16x1xf32>
    %73 = tpu.reciprocal %72 {approx = true} : vector<16x1xf32> -> vector<16x1xf32>
    %74 = vector.broadcast %73 : vector<16x1xf32> to vector<16x16xf32>
    %75 = arith.mulf %70, %74 : vector<16x16xf32>
    %cst_22 = arith.constant dense<0xFF800000> : vector<16xf32>
    %76 = vector.multi_reduction <maximumf>, %51, %cst_22 [1] : vector<16x16xf32> to vector<16xf32>
    %77 = vector.shape_cast %76 : vector<16xf32> to vector<16x1xf32>
    %78 = vector.broadcast %77 : vector<16x1xf32> to vector<16x16xf32>
    %79 = arith.subf %51, %78 : vector<16x16xf32>
    %80 = math.exp %79 : vector<16x16xf32>
    %cst_23 = arith.constant dense<0.000000e+00> : vector<16xf32>
    %81 = vector.multi_reduction <add>, %80, %cst_23 [1] : vector<16x16xf32> to vector<16xf32>
    %82 = vector.shape_cast %81 : vector<16xf32> to vector<16x1xf32>
    %83 = tpu.reciprocal %82 {approx = true} : vector<16x1xf32> -> vector<16x1xf32>
    %84 = vector.broadcast %83 : vector<16x1xf32> to vector<16x16xf32>
    %85 = arith.mulf %80, %84 : vector<16x16xf32>
    %cst_24 = arith.constant dense<0xFF800000> : vector<16xf32>
    %86 = vector.multi_reduction <maximumf>, %55, %cst_24 [1] : vector<16x16xf32> to vector<16xf32>
    %87 = vector.shape_cast %86 : vector<16xf32> to vector<16x1xf32>
    %88 = vector.broadcast %87 : vector<16x1xf32> to vector<16x16xf32>
    %89 = arith.subf %55, %88 : vector<16x16xf32>
    %90 = math.exp %89 : vector<16x16xf32>
    %cst_25 = arith.constant dense<0.000000e+00> : vector<16xf32>
    %91 = vector.multi_reduction <add>, %90, %cst_25 [1] : vector<16x16xf32> to vector<16xf32>
    %92 = vector.shape_cast %91 : vector<16xf32> to vector<16x1xf32>
    %93 = tpu.reciprocal %92 {approx = true} : vector<16x1xf32> -> vector<16x1xf32>
    %94 = vector.broadcast %93 : vector<16x1xf32> to vector<16x16xf32>
    %95 = arith.mulf %90, %94 : vector<16x16xf32>
    %96 = vector.extract_strided_slice %39 {offsets = [0, 64], sizes = [16, 8], strides = [1, 1]} : vector<16x96xf32> to vector<16x8xf32>
    %cst_26 = arith.constant dense<0.000000e+00> : vector<16x8xf32>
    %97 = tpu.matmul %65, %96, %cst_26 {dimension_numbers = #tpu.dot_dimension_numbers<[1], [0], [0], [1], [0, 0, 1, 1], [], []>} : vector<16x16xf32>, vector<16x8xf32>, vector<16x8xf32> -> vector<16x8xf32>
    %98 = vector.extract_strided_slice %39 {offsets = [0, 72], sizes = [16, 8], strides = [1, 1]} : vector<16x96xf32> to vector<16x8xf32>
    %cst_27 = arith.constant dense<0.000000e+00> : vector<16x8xf32>
    %99 = tpu.matmul %75, %98, %cst_27 {dimension_numbers = #tpu.dot_dimension_numbers<[1], [0], [0], [1], [0, 0, 1, 1], [], []>} : vector<16x16xf32>, vector<16x8xf32>, vector<16x8xf32> -> vector<16x8xf32>
    %100 = vector.extract_strided_slice %39 {offsets = [0, 80], sizes = [16, 8], strides = [1, 1]} : vector<16x96xf32> to vector<16x8xf32>
    %cst_28 = arith.constant dense<0.000000e+00> : vector<16x8xf32>
    %101 = tpu.matmul %85, %100, %cst_28 {dimension_numbers = #tpu.dot_dimension_numbers<[1], [0], [0], [1], [0, 0, 1, 1], [], []>} : vector<16x16xf32>, vector<16x8xf32>, vector<16x8xf32> -> vector<16x8xf32>
    %102 = vector.extract_strided_slice %39 {offsets = [0, 88], sizes = [16, 8], strides = [1, 1]} : vector<16x96xf32> to vector<16x8xf32>
    %cst_29 = arith.constant dense<0.000000e+00> : vector<16x8xf32>
    %103 = tpu.matmul %95, %102, %cst_29 {dimension_numbers = #tpu.dot_dimension_numbers<[1], [0], [0], [1], [0, 0, 1, 1], [], []>} : vector<16x16xf32>, vector<16x8xf32>, vector<16x8xf32> -> vector<16x8xf32>
    %104 = tpu.concatenate %97, %99, %101, %103 in 1 : vector<16x8xf32>, vector<16x8xf32>, vector<16x8xf32>, vector<16x8xf32> -> vector<16x32xf32>
    %cst_30 = arith.constant dense<0.000000e+00> : vector<16x32xf32>
    %105 = tpu.matmul %104, %2, %cst_30 {dimension_numbers = #tpu.dot_dimension_numbers<[1], [0], [0], [1], [0, 0, 1, 1], [], []>} : vector<16x32xf32>, vector<32x32xf32>, vector<16x32xf32> -> vector<16x32xf32>
    %106 = vector.broadcast %12 : vector<1x32xf32> to vector<16x32xf32>
    %107 = arith.addf %105, %106 : vector<16x32xf32>
    %108 = arith.addf %107, %0 : vector<16x32xf32>
    %cst_31 = arith.constant dense<0.000000e+00> : vector<16xf32>
    %109 = vector.multi_reduction <add>, %108, %cst_31 [1] : vector<16x32xf32> to vector<16xf32>
    %110 = vector.shape_cast %109 : vector<16xf32> to vector<16x1xf32>
    %cst_32 = arith.constant 3.200000e+01 : f32
    %111 = vector.broadcast %cst_32 : f32 to vector<16x1xf32>
    %112 = arith.divf %110, %111 : vector<16x1xf32>
    %113 = vector.broadcast %112 : vector<16x1xf32> to vector<16x32xf32>
    %114 = arith.subf %108, %113 : vector<16x32xf32>
    %115 = arith.mulf %114, %114 : vector<16x32xf32>
    %cst_33 = arith.constant dense<0.000000e+00> : vector<16xf32>
    %116 = vector.multi_reduction <add>, %115, %cst_33 [1] : vector<16x32xf32> to vector<16xf32>
    %117 = vector.shape_cast %116 : vector<16xf32> to vector<16x1xf32>
    %cst_34 = arith.constant 3.200000e+01 : f32
    %118 = vector.broadcast %cst_34 : f32 to vector<16x1xf32>
    %119 = arith.divf %117, %118 : vector<16x1xf32>
    %120 = vector.broadcast %112 : vector<16x1xf32> to vector<16x32xf32>
    %121 = arith.subf %108, %120 : vector<16x32xf32>
    %cst_35 = arith.constant 9.99999974E-6 : f32
    %122 = vector.broadcast %cst_35 : f32 to vector<16x1xf32>
    %123 = arith.addf %119, %122 : vector<16x1xf32>
    %124 = math.rsqrt %123 : vector<16x1xf32>
    %125 = vector.broadcast %124 : vector<16x1xf32> to vector<16x32xf32>
    %126 = arith.mulf %121, %125 : vector<16x32xf32>
    %127 = vector.broadcast %9 : vector<1x32xf32> to vector<16x32xf32>
    %128 = arith.mulf %126, %127 : vector<16x32xf32>
    %129 = vector.broadcast %10 : vector<1x32xf32> to vector<16x32xf32>
    %130 = arith.addf %128, %129 : vector<16x32xf32>
    %cst_36 = arith.constant dense<0.000000e+00> : vector<16x64xf32>
    %131 = tpu.matmul %130, %3, %cst_36 {dimension_numbers = #tpu.dot_dimension_numbers<[1], [0], [0], [1], [0, 0, 1, 1], [], []>} : vector<16x32xf32>, vector<32x64xf32>, vector<16x64xf32> -> vector<16x64xf32>
    %132 = vector.broadcast %13 : vector<1x64xf32> to vector<16x64xf32>
    %133 = arith.addf %131, %132 : vector<16x64xf32>
    %cst_37 = arith.constant 5.000000e-01 : f32
    %134 = vector.broadcast %cst_37 : f32 to vector<16x64xf32>
    %135 = arith.mulf %134, %133 : vector<16x64xf32>
    %cst_38 = arith.constant 0.707106769 : f32
    %136 = vector.broadcast %cst_38 : f32 to vector<16x64xf32>
    %137 = arith.mulf %133, %136 : vector<16x64xf32>
    %138 = math.erf %137 : vector<16x64xf32>
    %cst_39 = arith.constant 1.000000e+00 : f32
    %139 = vector.broadcast %cst_39 : f32 to vector<16x64xf32>
    %140 = arith.addf %139, %138 : vector<16x64xf32>
    %141 = arith.mulf %135, %140 : vector<16x64xf32>
    %cst_40 = arith.constant dense<0.000000e+00> : vector<16x32xf32>
    %142 = tpu.matmul %141, %5, %cst_40 {dimension_numbers = #tpu.dot_dimension_numbers<[1], [0], [0], [1], [0, 0, 1, 1], [], []>} : vector<16x64xf32>, vector<64x32xf32>, vector<16x32xf32> -> vector<16x32xf32>
    %143 = vector.broadcast %14 : vector<1x32xf32> to vector<16x32xf32>
    %144 = arith.addf %142, %143 : vector<16x32xf32>
    %145 = arith.addf %144, %108 : vector<16x32xf32>
    %c0_41 = arith.constant 0 : index
    %c0_42 = arith.constant 0 : index
    %146 = vector.load %arg3[%c0_41, %c0_42] : memref<16x32xf32, #tpu.memory_space<vmem>>, vector<16x32xf32>
    tpu.vector_store %arg3[%c0_41, %c0_42], %145 {strides = array<i32>} : memref<16x32xf32, #tpu.memory_space<vmem>>, vector<16x32xf32>,
    return
  }
  func.func @transform_0(%arg0: i32) -> (i32, i32) {
    %c0_i32 = arith.constant 0 : i32
    %c0_i32_0 = arith.constant 0 : i32
    %c0_i32_1 = arith.constant 0 : i32
    return %c0_i32, %c0_i32_0 : i32, i32
  }
  func.func @transform_1(%arg0: i32) -> (i32, i32) {
    %c0_i32 = arith.constant 0 : i32
    %c0_i32_0 = arith.constant 0 : i32
    %c0_i32_1 = arith.constant 0 : i32
    return %c0_i32, %c0_i32_0 : i32, i32
  }
  func.func @transform_2(%arg0: i32) -> (i32, i32) {
    %c0_i32 = arith.constant 0 : i32
    %c0_i32_0 = arith.constant 0 : i32
    %c0_i32_1 = arith.constant 0 : i32
    return %c0_i32, %c0_i32_0 : i32, i32
  }
}

</mosaic_0001>

<llo_original>
// kernel: tpu_custom_call.1
$region0: #{tpu_custom_call.1}
  #allocation0 [shape = 'u32[]', space=smem, size = 0x4, offset = 0x4, fixed_abs, tag = 'smem constant byte address 0x4 - core index']
  #allocation1 [shape = 'u32[144,128]{1,0:T(1,128)}', space=vmem, size = 0x12000, scoped, tag = 'internal scratch']
  %s0 = inlined_call_operand.hbm [shape: f32[16,32], index: 0, kind: input, shape index: {}]
  %s1 = inlined_call_operand.hbm [shape: f32[136,128], index: 1, kind: input, shape index: {}]
  %s2 = inlined_call_operand.hbm [shape: f32[16,32], index: 2, kind: output, shape index: {}]
  %s3 = sld [smem:[#allocation0]]
  $region26: #{tpu_custom_call.1} parent=0
    _
  %s5 = ssub.s32 1, %s3
  %s6 = scalar_select 0, %s5, %s3
  $region1: #{tpu_custom_call.1} parent=0
    #allocation2 [shape = 'u8[8192]{0}', space=vmem, size = 0x2000, scoped, tag = 'input window, operand 0, single buffered']
    #allocation3 [shape = 's32[1]{0}', space=sflag, size = 0x4, scoped, tag = 'scoped memory for tpu_custom_call.1']
    #allocation4 [shape = 's32[1]{0}', space=sflag, size = 0x4, scoped, tag = 'scoped memory for tpu_custom_call.1']
    #allocation5 [shape = 'u8[69632]{0}', space=vmem, size = 0x11000, scoped, tag = 'input window, operand 1, single buffered']
    #allocation6 [shape = 's32[1]{0}', space=sflag, size = 0x4, scoped, tag = 'scoped memory for tpu_custom_call.1']
    #allocation7 [shape = 'u8[8192]{0}', space=vmem, size = 0x2000, scoped, tag = 'output window, operand 0, single buffered']
    %7 = vsyncpa [#allocation3], 0
    %8 = vsyncpa [#allocation6], 0
    %9 = vsyncpa [#allocation4], 0
    // Predicated region
    $region2: #{tpu_custom_call.1} parent=1 // pred_check
      _
    $region3: #{tpu_custom_call.1} parent=1 // pred_check_branch
      %11 = sbr.rel (0) target = $region5
    $region4: #{tpu_custom_call.1} parent=1 // pred_region
      %s13 = ssub.s32 256, 256
      %14 = vsyncadd [#allocation3], %s13
      %s15 = sshll.u32 [#allocation2], 4
      %s16 = int_to_ptr.vmem [resolvable:$true] %s15
      %21 = dma.hbm_to_vmem [thread:$0]  %s0, 256, %s16, [#allocation3], 128, 128, 8
    $region5: #{tpu_custom_call.1} parent=1 // pred_fallthru
      _
    // Predicated region
    $region6: #{tpu_custom_call.1} parent=1 // pred_check
      _
    $region7: #{tpu_custom_call.1} parent=1 // pred_check_branch
      %23 = sbr.rel (0) target = $region9
    $region8: #{tpu_custom_call.1} parent=1 // pred_region
      %s25 = ssub.s32 2176, 2176
      %26 = vsyncadd [#allocation6], %s25
      %s27 = sshll.u32 [#allocation5], 4
      %s28 = int_to_ptr.vmem [resolvable:$true] %s27
      %33 = dma.hbm_to_vmem [thread:$0]  %s1, 2176, %s28, [#allocation6], 128, 128, 8
    $region9: #{tpu_custom_call.1} parent=1 // pred_fallthru
      _
    // Predicated region
    $region10: #{tpu_custom_call.1} parent=1 // pred_check
      _
    $region11: #{tpu_custom_call.1} parent=1 // pred_check_branch
      %35 = sbr.rel (0) target = $region13
    $region12: #{tpu_custom_call.1} parent=1 // pred_region
      %36 = dma.done [#allocation3], 256
    $region13: #{tpu_custom_call.1} parent=1 // pred_fallthru
      _
    // Predicated region
    $region14: #{tpu_custom_call.1} parent=1 // pred_check
      _
    $region15: #{tpu_custom_call.1} parent=1 // pred_check_branch
      %38 = sbr.rel (0) target = $region17
    $region16: #{tpu_custom_call.1} parent=1 // pred_region
      %39 = dma.done [#allocation6], 2176
    $region17: #{tpu_custom_call.1} parent=1 // pred_fallthru
      _
    %v40 = vld [vmem:[#allocation2] sm:$0xff]
    %v41 = vld [vmem:[#allocation2 + $0x8] sm:$0xff]
    %v42 = vld [vmem:[#allocation5] sm:$0xff]
    %v43 = vld [vmem:[#allocation5 + $0x8] sm:$0xff]
    %v44 = vld [vmem:[#allocation5 + $0x10] sm:$0xff]
    %v45 = vld [vmem:[#allocation5 + $0x18] sm:$0xff]
    %v46 = vld [vmem:[#allocation5 + $0x20] sm:$0xff]
    %v47 = vld [vmem:[#allocation5 + $0x28] sm:$0xff]
    %v48 = vld [vmem:[#allocation5 + $0x30] sm:$0xff]
    %v49 = vld [vmem:[#allocation5 + $0x38] sm:$0xff]
    %v50 = vld [vmem:[#allocation5 + $0x40] sm:$0xff]
    %v51 = vld [vmem:[#allocation5 + $0x48] sm:$0xff]
    %v52 = vld [vmem:[#allocation5 + $0x50] sm:$0xff]
    %v53 = vld [vmem:[#allocation5 + $0x58] sm:$0xff]
    %v54 = vld [vmem:[#allocation5 + $0x60] sm:$0xff]
    %v55 = vld [vmem:[#allocation5 + $0x68] sm:$0xff]
    %v56 = vld [vmem:[#allocation5 + $0x70] sm:$0xff]
    %v57 = vld [vmem:[#allocation5 + $0x78] sm:$0xff]
    %v58 = vld [vmem:[#allocation5 + $0x80] sm:$0x7]
    %vm59 = vcmask 261120
    %v60 = vsel %vm59, %v40, 0.0
    %61 = vadd.xlane.f32.xlu0 %v60
    %v62 = vpop.xlane.xlu0 %61
    %v63 = vsel %vm59, %v41, 0.0
    %64 = vadd.xlane.f32.xlu0 %v63
    %v65 = vpop.xlane.xlu0 %64
    %v66 = vrcp.pop 32.0
    %v67 = vmul.f32 %v62, %v66
    %v68 = vmul.f32 %v65, %v66
    %v69 = vsub.f32 %v40, %v67
    %v70 = vsub.f32 %v41, %v68
    %v71 = vmul.f32 %v69, %v69
    %v72 = vmul.f32 %v70, %v70
    %v73 = vsel %vm59, %v71, 0.0
    %74 = vadd.xlane.f32.xlu0 %v73
    %v75 = vpop.xlane.xlu0 %74
    %v76 = vsel %vm59, %v72, 0.0
    %77 = vadd.xlane.f32.xlu0 %v76
    %v78 = vpop.xlane.xlu0 %77
    %v79 = vmul.f32 %v75, %v66
    %v80 = vmul.f32 %v78, %v66
    %v81 = vadd.f32 %v79, 1e-05
    %v82 = vadd.f32 %v80, 1e-05
    %v83 = vrsqrt.pop %v81
    %v84 = vrsqrt.pop %v82
    %v85 = vmul.f32 %v69, %v83
    %v86 = vmul.f32 %v70, %v84
    %v87 = vlaneseq
    %v88 = vshrl.u32 %v87, 7
    %v89 = vsub.s32 0, %v88
    %v90 = vrot.slane %v58, %v89
    %v91 = vmul.f32 %v85, %v90
    %v92 = vmul.f32 %v86, %v90
    %94 = vrot.lane.b32.xlu0 %v90, 96
    %v95 = vpop.permute.xlu0 %94
    %v97 = vadd.f32 %v91, %v95
    %v98 = vadd.f32 %v92, %v95
    %v99 = vlaneseq
    %v100 = vshrl.u32 %v99, 7
    %v101 = vsub.s32 1, %v100
    %v102 = vrot.slane %v58, %v101
    %v104 = vsel %vm59, %v97, 0
    %v107 = vsel %vm59, %v98, 0
    %109 = vmatprep.subr.mxu0 0.0
    %110 = vmatpush1.msra.mxu0 %v42
    %111 = vmatprep.subr.mxu0 0.0
    %112 = vmatpush1.msra.mxu0 %v43
    %113 = vmatprep.subr.mxu0 0.0
    %114 = vmatpush1.msra.mxu0 %v44
    %115 = vmatprep.subr.mxu0 0.0
    %116 = vmatpush1.msra.mxu0 %v45
    %117 = vmatprep.subr.mxu0 0.0
    %118 = vmatpush1.msra.mxu0 0.0
    %119 = vmatprep.subr.mxu0 0.0
    %120 = vmatpush1.msra.mxu0 0.0
    %121 = vmatprep.subr.mxu0 0.0
    %122 = vmatpush1.msra.mxu0 0.0
    %123 = vmatprep.subr.mxu0 0.0
    %124 = vmatpush1.msra.mxu0 0.0
    %125 = vmatprep.subr.mxu0 0.0
    %126 = vmatpush1.msra.mxu0 0.0
    %127 = vmatprep.subr.mxu0 0.0
    %128 = vmatpush1.msra.mxu0 0.0
    %129 = vmatprep.subr.mxu0 0.0
    %130 = vmatpush1.msra.mxu0 0.0
    %131 = vmatprep.subr.mxu0 0.0
    %132 = vmatpush1.msra.mxu0 0.0
    %133 = vmatprep.subr.mxu0 0.0
    %134 = vmatpush1.msra.mxu0 0.0
    %135 = vmatprep.subr.mxu0 0.0
    %136 = vmatpush1.msra.mxu0 0.0
    %137 = vmatprep.subr.mxu0 0.0
    %138 = vmatpush1.msra.mxu0 0.0
    %139 = vmatprep.subr.mxu0 0.0
    %140 = vmatpush1.msra.mxu0 0.0
    %141 = vmatprep.subr.mxu0 0.0
    %142 = vmatpush1.msra.mxu0 0.0
    %143 = vmatprep.subr.mxu0 0.0
    %144 = vmatpush1.msra.mxu0 0.0
    %145 = vmatprep.subr.mxu0 0.0
    %146 = vmatpush1.msra.mxu0 0.0
    %147 = vmatprep.subr.mxu0 0.0
    %148 = vmatpush1.msra.mxu0 0.0
    %149 = vmatprep.subr.mxu0 0.0
    %150 = vmatpush1.msra.mxu0 0.0
    %151 = vmatprep.subr.mxu0 0.0
    %152 = vmatpush1.msra.mxu0 0.0
    %153 = vmatprep.subr.mxu0 0.0
    %154 = vmatpush1.msra.mxu0 0.0
    %155 = vmatprep.subr.mxu0 0.0
    %156 = vmatpush1.msra.mxu0 0.0
    %157 = vmatprep.subr.mxu0 0.0
    %158 = vmatpush1.msra.mxu0 0.0
    %159 = vmatprep.subr.mxu0 0.0
    %160 = vmatpush1.msra.mxu0 0.0
    %161 = vmatprep.subr.mxu0 0.0
    %162 = vmatpush1.msra.mxu0 0.0
    %163 = vmatprep.subr.mxu0 0.0
    %164 = vmatpush1.msra.mxu0 0.0
    %165 = vmatprep.subr.mxu0 0.0
    %166 = vmatpush1.msra.mxu0 0.0
    %167 = vmatprep.subr.mxu0 0.0
    %168 = vmatpush1.msra.mxu0 0.0
    %169 = vmatprep.subr.mxu0 0.0
    %170 = vmatpush1.msra.mxu0 0.0
    %171 = vmatprep.subr.mxu0 0.0
    %172 = vmatpush1.msra.mxu0 0.0
    %173 = vmatprep.mubr.f32.mxu0 0.0
    %174 = vmatmul.mubr.f32.gmra.mrb[0].mxu0 %v104
    %v175 = vpop.f32.mrb[0].mxu0
    %v176 = vadd.f32 %v102, %v175
    %v177 = vpop.f32.mrb[0].mxu0
    %178 = vmatprep.mubr.f32.mxu0 0.0
    %179 = vmatmul.mubr.f32.gmra.mrb[0].mxu0 %v107
    %v180 = vpop.f32.mrb[0].mxu0
    %v181 = vadd.f32 %v102, %v180
    %v182 = vpop.f32.mrb[0].mxu0
    %183 = vdwg.mxu0
    %186 = vrot.lane.b32.xlu0 %v176, 96
    %v187 = vpop.permute.xlu0 %186
    %188 = vrot.lane.b32.xlu0 %v181, 96
    %v189 = vpop.permute.xlu0 %188
    %192 = vrot.lane.b32.xlu0 %v46, 64
    %v193 = vpop.permute.xlu0 %192
    %194 = vrot.lane.b32.xlu0 %v47, 64
    %v195 = vpop.permute.xlu0 %194
    %vm198 = vcmask 64512
    %v199 = vsel %vm198, %v176, 0
    %v201 = vsel %vm198, %v181, 0
    %v203 = vsel %vm198, %v187, 0
    %v205 = vsel %vm198, %v189, 0
    %207 = vmatprep.subr.mxu0 0.0
    %208 = vmatpush1.xpose.msra.mxu0 %v203
    %209 = vmatprep.subr.mxu0 0.0
    %210 = vmatpush1.xpose.msra.mxu0 %v205
    %211 = vmatprep.subr.mxu0 0.0
    %212 = vmatpush1.xpose.msra.mxu0 0.0
    %213 = vmatprep.subr.mxu0 0.0
    %214 = vmatpush1.xpose.msra.mxu0 0.0
    %215 = vmatprep.subr.mxu0 0.0
    %216 = vmatpush1.xpose.msra.mxu0 0.0
    %217 = vmatprep.subr.mxu0 0.0
    %218 = vmatpush1.xpose.msra.mxu0 0.0
    %219 = vmatprep.subr.mxu0 0.0
    %220 = vmatpush1.xpose.msra.mxu0 0.0
    %221 = vmatprep.subr.mxu0 0.0
    %222 = vmatpush1.xpose.msra.mxu0 0.0
    %223 = vmatprep.subr.mxu0 0.0
    %224 = vmatpush1.xpose.msra.mxu0 0.0
    %225 = vmatprep.subr.mxu0 0.0
    %226 = vmatpush1.xpose.msra.mxu0 0.0
    %227 = vmatprep.subr.mxu0 0.0
    %228 = vmatpush1.xpose.msra.mxu0 0.0
    %229 = vmatprep.subr.mxu0 0.0
    %230 = vmatpush1.xpose.msra.mxu0 0.0
    %231 = vmatprep.subr.mxu0 0.0
    %232 = vmatpush1.xpose.msra.mxu0 0.0
    %233 = vmatprep.subr.mxu0 0.0
    %234 = vmatpush1.xpose.msra.mxu0 0.0
    %235 = vmatprep.subr.mxu0 0.0
    %236 = vmatpush1.xpose.msra.mxu0 0.0
    %237 = vmatprep.subr.mxu0 0.0
    %238 = vmatpush1.xpose.msra.mxu0 0.0
    %239 = vmatprep.subr.mxu0 0.0
    %240 = vmatpush1.xpose.msra.mxu0 0.0
    %241 = vmatprep.subr.mxu0 0.0
    %242 = vmatpush1.xpose.msra.mxu0 0.0
    %243 = vmatprep.subr.mxu0 0.0
    %244 = vmatpush1.xpose.msra.mxu0 0.0
    %245 = vmatprep.subr.mxu0 0.0
    %246 = vmatpush1.xpose.msra.mxu0 0.0
    %247 = vmatprep.subr.mxu0 0.0
    %248 = vmatpush1.xpose.msra.mxu0 0.0
    %249 = vmatprep.subr.mxu0 0.0
    %250 = vmatpush1.xpose.msra.mxu0 0.0
    %251 = vmatprep.subr.mxu0 0.0
    %252 = vmatpush1.xpose.msra.mxu0 0.0
    %253 = vmatprep.subr.mxu0 0.0
    %254 = vmatpush1.xpose.msra.mxu0 0.0
    %255 = vmatprep.subr.mxu0 0.0
    %256 = vmatpush1.xpose.msra.mxu0 0.0
    %257 = vmatprep.subr.mxu0 0.0
    %258 = vmatpush1.xpose.msra.mxu0 0.0
    %259 = vmatprep.subr.mxu0 0.0
    %260 = vmatpush1.xpose.msra.mxu0 0.0
    %261 = vmatprep.subr.mxu0 0.0
    %262 = vmatpush1.xpose.msra.mxu0 0.0
    %263 = vmatprep.subr.mxu0 0.0
    %264 = vmatpush1.xpose.msra.mxu0 0.0
    %265 = vmatprep.subr.mxu0 0.0
    %266 = vmatpush1.xpose.msra.mxu0 0.0
    %267 = vmatprep.subr.mxu0 0.0
    %268 = vmatpush1.xpose.msra.mxu0 0.0
    %269 = vmatprep.subr.mxu0 0.0
    %270 = vmatpush1.xpose.msra.mxu0 0.0
    %271 = vmatprep.mubr.f32.mxu0 0.0
    %272 = vmatmul.mubr.f32.gmra.mrb[0].mxu0 %v199
    %v273 = vpop.f32.mrb[0].mxu0
    %v274 = vadd.f32 %v193, %v273
    %v275 = vpop.f32.mrb[0].mxu0
    %276 = vmatprep.mubr.f32.mxu0 0.0
    %277 = vmatmul.mubr.f32.gmra.mrb[0].mxu0 %v201
    %v278 = vpop.f32.mrb[0].mxu0
    %v279 = vadd.f32 %v195, %v278
    %v280 = vpop.f32.mrb[0].mxu0
    %281 = vdwg.mxu0
    %282 = vrot.lane.b32.xlu0 %v176, 120
    %v283 = vpop.permute.xlu0 %282
    %284 = vrot.lane.b32.xlu0 %v181, 120
    %v285 = vpop.permute.xlu0 %284
    %286 = vrot.lane.b32.xlu0 %v176, 88
    %v287 = vpop.permute.xlu0 %286
    %288 = vrot.lane.b32.xlu0 %v181, 88
    %v289 = vpop.permute.xlu0 %288
    %v290 = vsel %vm198, %v283, 0
    %v292 = vsel %vm198, %v285, 0
    %v294 = vsel %vm198, %v287, 0
    %v296 = vsel %vm198, %v289, 0
    %298 = vmatprep.subr.mxu0 0.0
    %299 = vmatpush1.xpose.msra.mxu0 %v294
    %300 = vmatprep.subr.mxu0 0.0
    %301 = vmatpush1.xpose.msra.mxu0 %v296
    %302 = vmatprep.subr.mxu0 0.0
    %303 = vmatpush1.xpose.msra.mxu0 0.0
    %304 = vmatprep.subr.mxu0 0.0
    %305 = vmatpush1.xpose.msra.mxu0 0.0
    %306 = vmatprep.subr.mxu0 0.0
    %307 = vmatpush1.xpose.msra.mxu0 0.0
    %308 = vmatprep.subr.mxu0 0.0
    %309 = vmatpush1.xpose.msra.mxu0 0.0
    %310 = vmatprep.subr.mxu0 0.0
    %311 = vmatpush1.xpose.msra.mxu0 0.0
    %312 = vmatprep.subr.mxu0 0.0
    %313 = vmatpush1.xpose.msra.mxu0 0.0
    %314 = vmatprep.subr.mxu0 0.0
    %315 = vmatpush1.xpose.msra.mxu0 0.0
    %316 = vmatprep.subr.mxu0 0.0
    %317 = vmatpush1.xpose.msra.mxu0 0.0
    %318 = vmatprep.subr.mxu0 0.0
    %319 = vmatpush1.xpose.msra.mxu0 0.0
    %320 = vmatprep.subr.mxu0 0.0
    %321 = vmatpush1.xpose.msra.mxu0 0.0
    %322 = vmatprep.subr.mxu0 0.0
    %323 = vmatpush1.xpose.msra.mxu0 0.0
    %324 = vmatprep.subr.mxu0 0.0
    %325 = vmatpush1.xpose.msra.mxu0 0.0
    %326 = vmatprep.subr.mxu0 0.0
    %327 = vmatpush1.xpose.msra.mxu0 0.0
    %328 = vmatprep.subr.mxu0 0.0
    %329 = vmatpush1.xpose.msra.mxu0 0.0
    %330 = vmatprep.subr.mxu0 0.0
    %331 = vmatpush1.xpose.msra.mxu0 0.0
    %332 = vmatprep.subr.mxu0 0.0
    %333 = vmatpush1.xpose.msra.mxu0 0.0
    %334 = vmatprep.subr.mxu0 0.0
    %335 = vmatpush1.xpose.msra.mxu0 0.0
    %336 = vmatprep.subr.mxu0 0.0
    %337 = vmatpush1.xpose.msra.mxu0 0.0
    %338 = vmatprep.subr.mxu0 0.0
    %339 = vmatpush1.xpose.msra.mxu0 0.0
    %340 = vmatprep.subr.mxu0 0.0
    %341 = vmatpush1.xpose.msra.mxu0 0.0
    %342 = vmatprep.subr.mxu0 0.0
    %343 = vmatpush1.xpose.msra.mxu0 0.0
    %344 = vmatprep.subr.mxu0 0.0
    %345 = vmatpush1.xpose.msra.mxu0 0.0
    %346 = vmatprep.subr.mxu0 0.0
    %347 = vmatpush1.xpose.msra.mxu0 0.0
    %348 = vmatprep.subr.mxu0 0.0
    %349 = vmatpush1.xpose.msra.mxu0 0.0
    %350 = vmatprep.subr.mxu0 0.0
    %351 = vmatpush1.xpose.msra.mxu0 0.0
    %352 = vmatprep.subr.mxu0 0.0
    %353 = vmatpush1.xpose.msra.mxu0 0.0
    %354 = vmatprep.subr.mxu0 0.0
    %355 = vmatpush1.xpose.msra.mxu0 0.0
    %356 = vmatprep.subr.mxu0 0.0
    %357 = vmatpush1.xpose.msra.mxu0 0.0
    %358 = vmatprep.subr.mxu0 0.0
    %359 = vmatpush1.xpose.msra.mxu0 0.0
    %360 = vmatprep.subr.mxu0 0.0
    %361 = vmatpush1.xpose.msra.mxu0 0.0
    %362 = vmatprep.mubr.f32.mxu0 0.0
    %363 = vmatmul.mubr.f32.gmra.mrb[0].mxu0 %v290
    %v364 = vpop.f32.mrb[0].mxu0
    %v365 = vadd.f32 %v193, %v364
    %v366 = vpop.f32.mrb[0].mxu0
    %367 = vmatprep.mubr.f32.mxu0 0.0
    %368 = vmatmul.mubr.f32.gmra.mrb[0].mxu0 %v292
    %v369 = vpop.f32.mrb[0].mxu0
    %v370 = vadd.f32 %v195, %v369
    %v371 = vpop.f32.mrb[0].mxu0
    %372 = vdwg.mxu0
    %373 = vrot.lane.b32.xlu0 %v176, 112
    %v374 = vpop.permute.xlu0 %373
    %375 = vrot.lane.b32.xlu0 %v181, 112
    %v376 = vpop.permute.xlu0 %375
    %377 = vrot.lane.b32.xlu0 %v176, 80
    %v378 = vpop.permute.xlu0 %377
    %379 = vrot.lane.b32.xlu0 %v181, 80
    %v380 = vpop.permute.xlu0 %379
    %v381 = vsel %vm198, %v374, 0
    %v383 = vsel %vm198, %v376, 0
    %v385 = vsel %vm198, %v378, 0
    %v387 = vsel %vm198, %v380, 0
    %389 = vmatprep.subr.mxu0 0.0
    %390 = vmatpush1.xpose.msra.mxu0 %v385
    %391 = vmatprep.subr.mxu0 0.0
    %392 = vmatpush1.xpose.msra.mxu0 %v387
    %393 = vmatprep.subr.mxu0 0.0
    %394 = vmatpush1.xpose.msra.mxu0 0.0
    %395 = vmatprep.subr.mxu0 0.0
    %396 = vmatpush1.xpose.msra.mxu0 0.0
    %397 = vmatprep.subr.mxu0 0.0
    %398 = vmatpush1.xpose.msra.mxu0 0.0
    %399 = vmatprep.subr.mxu0 0.0
    %400 = vmatpush1.xpose.msra.mxu0 0.0
    %401 = vmatprep.subr.mxu0 0.0
    %402 = vmatpush1.xpose.msra.mxu0 0.0
    %403 = vmatprep.subr.mxu0 0.0
    %404 = vmatpush1.xpose.msra.mxu0 0.0
    %405 = vmatprep.subr.mxu0 0.0
    %406 = vmatpush1.xpose.msra.mxu0 0.0
    %407 = vmatprep.subr.mxu0 0.0
    %408 = vmatpush1.xpose.msra.mxu0 0.0
    %409 = vmatprep.subr.mxu0 0.0
    %410 = vmatpush1.xpose.msra.mxu0 0.0
    %411 = vmatprep.subr.mxu0 0.0
    %412 = vmatpush1.xpose.msra.mxu0 0.0
    %413 = vmatprep.subr.mxu0 0.0
    %414 = vmatpush1.xpose.msra.mxu0 0.0
    %415 = vmatprep.subr.mxu0 0.0
    %416 = vmatpush1.xpose.msra.mxu0 0.0
    %417 = vmatprep.subr.mxu0 0.0
    %418 = vmatpush1.xpose.msra.mxu0 0.0
    %419 = vmatprep.subr.mxu0 0.0
    %420 = vmatpush1.xpose.msra.mxu0 0.0
    %421 = vmatprep.subr.mxu0 0.0
    %422 = vmatpush1.xpose.msra.mxu0 0.0
    %423 = vmatprep.subr.mxu0 0.0
    %424 = vmatpush1.xpose.msra.mxu0 0.0
    %425 = vmatprep.subr.mxu0 0.0
    %426 = vmatpush1.xpose.msra.mxu0 0.0
    %427 = vmatprep.subr.mxu0 0.0
    %428 = vmatpush1.xpose.msra.mxu0 0.0
    %429 = vmatprep.subr.mxu0 0.0
    %430 = vmatpush1.xpose.msra.mxu0 0.0
    %431 = vmatprep.subr.mxu0 0.0
    %432 = vmatpush1.xpose.msra.mxu0 0.0
    %433 = vmatprep.subr.mxu0 0.0
    %434 = vmatpush1.xpose.msra.mxu0 0.0
    %435 = vmatprep.subr.mxu0 0.0
    %436 = vmatpush1.xpose.msra.mxu0 0.0
    %437 = vmatprep.subr.mxu0 0.0
    %438 = vmatpush1.xpose.msra.mxu0 0.0
    %439 = vmatprep.subr.mxu0 0.0
    %440 = vmatpush1.xpose.msra.mxu0 0.0
    %441 = vmatprep.subr.mxu0 0.0
    %442 = vmatpush1.xpose.msra.mxu0 0.0
    %443 = vmatprep.subr.mxu0 0.0
    %444 = vmatpush1.xpose.msra.mxu0 0.0
    %445 = vmatprep.subr.mxu0 0.0
    %446 = vmatpush1.xpose.msra.mxu0 0.0
    %447 = vmatprep.subr.mxu0 0.0
    %448 = vmatpush1.xpose.msra.mxu0 0.0
    %449 = vmatprep.subr.mxu0 0.0
    %450 = vmatpush1.xpose.msra.mxu0 0.0
    %451 = vmatprep.subr.mxu0 0.0
    %452 = vmatpush1.xpose.msra.mxu0 0.0
    %453 = vmatprep.mubr.f32.mxu0 0.0
    %454 = vmatmul.mubr.f32.gmra.mrb[0].mxu0 %v381
    %v455 = vpop.f32.mrb[0].mxu0
    %v456 = vadd.f32 %v193, %v455
    %v457 = vpop.f32.mrb[0].mxu0
    %458 = vmatprep.mubr.f32.mxu0 0.0
    %459 = vmatmul.mubr.f32.gmra.mrb[0].mxu0 %v383
    %v460 = vpop.f32.mrb[0].mxu0
    %v461 = vadd.f32 %v195, %v460
    %v462 = vpop.f32.mrb[0].mxu0
    %463 = vdwg.mxu0
    %464 = vrot.lane.b32.xlu0 %v176, 104
    %v465 = vpop.permute.xlu0 %464
    %466 = vrot.lane.b32.xlu0 %v181, 104
    %v467 = vpop.permute.xlu0 %466
    %468 = vrot.lane.b32.xlu0 %v176, 72
    %v469 = vpop.permute.xlu0 %468
    %470 = vrot.lane.b32.xlu0 %v181, 72
    %v471 = vpop.permute.xlu0 %470
    %v472 = vsel %vm198, %v465, 0
    %v474 = vsel %vm198, %v467, 0
    %v476 = vsel %vm198, %v469, 0
    %v478 = vsel %vm198, %v471, 0
    %480 = vmatprep.subr.mxu0 0.0
    %481 = vmatpush1.xpose.msra.mxu0 %v476
    %482 = vmatprep.subr.mxu0 0.0
    %483 = vmatpush1.xpose.msra.mxu0 %v478
    %484 = vmatprep.subr.mxu0 0.0
    %485 = vmatpush1.xpose.msra.mxu0 0.0
    %486 = vmatprep.subr.mxu0 0.0
    %487 = vmatpush1.xpose.msra.mxu0 0.0
    %488 = vmatprep.subr.mxu0 0.0
    %489 = vmatpush1.xpose.msra.mxu0 0.0
    %490 = vmatprep.subr.mxu0 0.0
    %491 = vmatpush1.xpose.msra.mxu0 0.0
    %492 = vmatprep.subr.mxu0 0.0
    %493 = vmatpush1.xpose.msra.mxu0 0.0
    %494 = vmatprep.subr.mxu0 0.0
    %495 = vmatpush1.xpose.msra.mxu0 0.0
    %496 = vmatprep.subr.mxu0 0.0
    %497 = vmatpush1.xpose.msra.mxu0 0.0
    %498 = vmatprep.subr.mxu0 0.0
    %499 = vmatpush1.xpose.msra.mxu0 0.0
    %500 = vmatprep.subr.mxu0 0.0
    %501 = vmatpush1.xpose.msra.mxu0 0.0
    %502 = vmatprep.subr.mxu0 0.0
    %503 = vmatpush1.xpose.msra.mxu0 0.0
    %504 = vmatprep.subr.mxu0 0.0
    %505 = vmatpush1.xpose.msra.mxu0 0.0
    %506 = vmatprep.subr.mxu0 0.0
    %507 = vmatpush1.xpose.msra.mxu0 0.0
    %508 = vmatprep.subr.mxu0 0.0
    %509 = vmatpush1.xpose.msra.mxu0 0.0
    %510 = vmatprep.subr.mxu0 0.0
    %511 = vmatpush1.xpose.msra.mxu0 0.0
    %512 = vmatprep.subr.mxu0 0.0
    %513 = vmatpush1.xpose.msra.mxu0 0.0
    %514 = vmatprep.subr.mxu0 0.0
    %515 = vmatpush1.xpose.msra.mxu0 0.0
    %516 = vmatprep.subr.mxu0 0.0
    %517 = vmatpush1.xpose.msra.mxu0 0.0
    %518 = vmatprep.subr.mxu0 0.0
    %519 = vmatpush1.xpose.msra.mxu0 0.0
    %520 = vmatprep.subr.mxu0 0.0
    %521 = vmatpush1.xpose.msra.mxu0 0.0
    %522 = vmatprep.subr.mxu0 0.0
    %523 = vmatpush1.xpose.msra.mxu0 0.0
    %524 = vmatprep.subr.mxu0 0.0
    %525 = vmatpush1.xpose.msra.mxu0 0.0
    %526 = vmatprep.subr.mxu0 0.0
    %527 = vmatpush1.xpose.msra.mxu0 0.0
    %528 = vmatprep.subr.mxu0 0.0
    %529 = vmatpush1.xpose.msra.mxu0 0.0
    %530 = vmatprep.subr.mxu0 0.0
    %531 = vmatpush1.xpose.msra.mxu0 0.0
    %532 = vmatprep.subr.mxu0 0.0
    %533 = vmatpush1.xpose.msra.mxu0 0.0
    %534 = vmatprep.subr.mxu0 0.0
    %535 = vmatpush1.xpose.msra.mxu0 0.0
    %536 = vmatprep.subr.mxu0 0.0
    %537 = vmatpush1.xpose.msra.mxu0 0.0
    %538 = vmatprep.subr.mxu0 0.0
    %539 = vmatpush1.xpose.msra.mxu0 0.0
    %540 = vmatprep.subr.mxu0 0.0
    %541 = vmatpush1.xpose.msra.mxu0 0.0
    %542 = vmatprep.subr.mxu0 0.0
    %543 = vmatpush1.xpose.msra.mxu0 0.0
    %544 = vmatprep.mubr.f32.mxu0 0.0
    %545 = vmatmul.mubr.f32.gmra.mrb[0].mxu0 %v472
    %v546 = vpop.f32.mrb[0].mxu0
    %v547 = vadd.f32 %v193, %v546
    %v548 = vpop.f32.mrb[0].mxu0
    %549 = vmatprep.mubr.f32.mxu0 0.0
    %550 = vmatmul.mubr.f32.gmra.mrb[0].mxu0 %v474
    %v551 = vpop.f32.mrb[0].mxu0
    %v552 = vadd.f32 %v195, %v551
    %v553 = vpop.f32.mrb[0].mxu0
    %554 = vdwg.mxu0
    %vm555 = vcmask 130048
    %v556 = vsel %vm555, %v274, -inf
    %557 = vmax.xlane.f32.xlu0 %v556
    %v558 = vpop.xlane.xlu0 %557
    %v559 = vsel %vm555, %v279, -inf
    %560 = vmax.xlane.f32.xlu0 %v559
    %v561 = vpop.xlane.xlu0 %560
    %v562 = vsub.f32 %v274, %v558
    %v563 = vsub.f32 %v279, %v561
    %v564 = vmul.f32 %v562, 1.442695
    %v565 = vpow.pop %v564
    %v566 = vmul.f32 %v563, 1.442695
    %v567 = vpow.pop %v566
    %v568 = vsel %vm555, %v565, 0.0
    %569 = vadd.xlane.f32.xlu0 %v568
    %v570 = vpop.xlane.xlu0 %569
    %v571 = vsel %vm555, %v567, 0.0
    %572 = vadd.xlane.f32.xlu0 %v571
    %v573 = vpop.xlane.xlu0 %572
    %v574 = vrcp.pop %v570
    %v575 = vrcp.pop %v573
    %v576 = vmul.f32 %v565, %v574
    %v577 = vmul.f32 %v567, %v575
    %v578 = vsel %vm555, %v365, -inf
    %579 = vmax.xlane.f32.xlu0 %v578
    %v580 = vpop.xlane.xlu0 %579
    %v581 = vsel %vm555, %v370, -inf
    %582 = vmax.xlane.f32.xlu0 %v581
    %v583 = vpop.xlane.xlu0 %582
    %v584 = vsub.f32 %v365, %v580
    %v585 = vsub.f32 %v370, %v583
    %v586 = vmul.f32 %v584, 1.442695
    %v587 = vpow.pop %v586
    %v588 = vmul.f32 %v585, 1.442695
    %v589 = vpow.pop %v588
    %v590 = vsel %vm555, %v587, 0.0
    %591 = vadd.xlane.f32.xlu0 %v590
    %v592 = vpop.xlane.xlu0 %591
    %v593 = vsel %vm555, %v589, 0.0
    %594 = vadd.xlane.f32.xlu0 %v593
    %v595 = vpop.xlane.xlu0 %594
    %v596 = vrcp.pop %v592
    %v597 = vrcp.pop %v595
    %v598 = vmul.f32 %v587, %v596
    %v599 = vmul.f32 %v589, %v597
    %v600 = vsel %vm555, %v456, -inf
    %601 = vmax.xlane.f32.xlu0 %v600
    %v602 = vpop.xlane.xlu0 %601
    %v603 = vsel %vm555, %v461, -inf
    %604 = vmax.xlane.f32.xlu0 %v603
    %v605 = vpop.xlane.xlu0 %604
    %v606 = vsub.f32 %v456, %v602
    %v607 = vsub.f32 %v461, %v605
    %v608 = vmul.f32 %v606, 1.442695
    %v609 = vpow.pop %v608
    %v610 = vmul.f32 %v607, 1.442695
    %v611 = vpow.pop %v610
    %v612 = vsel %vm555, %v609, 0.0
    %613 = vadd.xlane.f32.xlu0 %v612
    %v614 = vpop.xlane.xlu0 %613
    %v615 = vsel %vm555, %v611, 0.0
    %616 = vadd.xlane.f32.xlu0 %v615
    %v617 = vpop.xlane.xlu0 %616
    %v618 = vrcp.pop %v614
    %v619 = vrcp.pop %v617
    %v620 = vmul.f32 %v609, %v618
    %v621 = vmul.f32 %v611, %v619
    %v622 = vsel %vm555, %v547, -inf
    %623 = vmax.xlane.f32.xlu0 %v622
    %v624 = vpop.xlane.xlu0 %623
    %v625 = vsel %vm555, %v552, -inf
    %626 = vmax.xlane.f32.xlu0 %v625
    %v627 = vpop.xlane.xlu0 %626
    %v628 = vsub.f32 %v547, %v624
    %v629 = vsub.f32 %v552, %v627
    %v630 = vmul.f32 %v628, 1.442695
    %v631 = vpow.pop %v630
    %v632 = vmul.f32 %v629, 1.442695
    %v633 = vpow.pop %v632
    %v634 = vsel %vm555, %v631, 0.0
    %635 = vadd.xlane.f32.xlu0 %v634
    %v636 = vpop.xlane.xlu0 %635
    %v637 = vsel %vm555, %v633, 0.0
    %638 = vadd.xlane.f32.xlu0 %v637
    %v639 = vpop.xlane.xlu0 %638
    %v640 = vrcp.pop %v636
    %v641 = vrcp.pop %v639
    %v642 = vmul.f32 %v631, %v640
    %v643 = vmul.f32 %v633, %v641
    %644 = vrot.lane.b32.xlu0 %v176, 64
    %v645 = vpop.permute.xlu0 %644
    %646 = vrot.lane.b32.xlu0 %v181, 64
    %v647 = vpop.permute.xlu0 %646
    %v651 = vsel %vm555, %v576, 0
    %v654 = vsel %vm555, %v577, 0
    %656 = vmatprep.subr.mxu0 0.0
    %657 = vmatpush1.msra.mxu0 %v645
    %658 = vmatprep.subr.mxu0 0.0
    %659 = vmatpush1.msra.mxu0 %v647
    %660 = vmatprep.subr.mxu0 0.0
    %661 = vmatpush1.msra.mxu0 0.0
    %662 = vmatprep.subr.mxu0 0.0
    %663 = vmatpush1.msra.mxu0 0.0
    %664 = vmatprep.subr.mxu0 0.0
    %665 = vmatpush1.msra.mxu0 0.0
    %666 = vmatprep.subr.mxu0 0.0
    %667 = vmatpush1.msra.mxu0 0.0
    %668 = vmatprep.subr.mxu0 0.0
    %669 = vmatpush1.msra.mxu0 0.0
    %670 = vmatprep.subr.mxu0 0.0
    %671 = vmatpush1.msra.mxu0 0.0
    %672 = vmatprep.subr.mxu0 0.0
    %673 = vmatpush1.msra.mxu0 0.0
    %674 = vmatprep.subr.mxu0 0.0
    %675 = vmatpush1.msra.mxu0 0.0
    %676 = vmatprep.subr.mxu0 0.0
    %677 = vmatpush1.msra.mxu0 0.0
    %678 = vmatprep.subr.mxu0 0.0
    %679 = vmatpush1.msra.mxu0 0.0
    %680 = vmatprep.subr.mxu0 0.0
    %681 = vmatpush1.msra.mxu0 0.0
    %682 = vmatprep.subr.mxu0 0.0
    %683 = vmatpush1.msra.mxu0 0.0
    %684 = vmatprep.subr.mxu0 0.0
    %685 = vmatpush1.msra.mxu0 0.0
    %686 = vmatprep.subr.mxu0 0.0
    %687 = vmatpush1.msra.mxu0 0.0
    %688 = vmatprep.subr.mxu0 0.0
    %689 = vmatpush1.msra.mxu0 0.0
    %690 = vmatprep.subr.mxu0 0.0
    %691 = vmatpush1.msra.mxu0 0.0
    %692 = vmatprep.subr.mxu0 0.0
    %693 = vmatpush1.msra.mxu0 0.0
    %694 = vmatprep.subr.mxu0 0.0
    %695 = vmatpush1.msra.mxu0 0.0
    %696 = vmatprep.subr.mxu0 0.0
    %697 = vmatpush1.msra.mxu0 0.0
    %698 = vmatprep.subr.mxu0 0.0
    %699 = vmatpush1.msra.mxu0 0.0
    %700 = vmatprep.subr.mxu0 0.0
    %701 = vmatpush1.msra.mxu0 0.0
    %702 = vmatprep.subr.mxu0 0.0
    %703 = vmatpush1.msra.mxu0 0.0
    %704 = vmatprep.subr.mxu0 0.0
    %705 = vmatpush1.msra.mxu0 0.0
    %706 = vmatprep.subr.mxu0 0.0
    %707 = vmatpush1.msra.mxu0 0.0
    %708 = vmatprep.subr.mxu0 0.0
    %709 = vmatpush1.msra.mxu0 0.0
    %710 = vmatprep.subr.mxu0 0.0
    %711 = vmatpush1.msra.mxu0 0.0
    %712 = vmatprep.subr.mxu0 0.0
    %713 = vmatpush1.msra.mxu0 0.0
    %714 = vmatprep.subr.mxu0 0.0
    %715 = vmatpush1.msra.mxu0 0.0
    %716 = vmatprep.subr.mxu0 0.0
    %717 = vmatpush1.msra.mxu0 0.0
    %718 = vmatprep.subr.mxu0 0.0
    %719 = vmatpush1.msra.mxu0 0.0
    %720 = vmatprep.mubr.f32.mxu0 0.0
    %721 = vmatmul.mubr.f32.gmra.mrb[0].mxu0 %v651
    %v722 = vpop.f32.mrb[0].mxu0
    %v723 = vadd.f32 0.0, %v722
    %v724 = vpop.f32.mrb[0].mxu0
    %725 = vmatprep.mubr.f32.mxu0 0.0
    %726 = vmatmul.mubr.f32.gmra.mrb[0].mxu0 %v654
    %v727 = vpop.f32.mrb[0].mxu0
    %v728 = vadd.f32 0.0, %v727
    %v729 = vpop.f32.mrb[0].mxu0
    %730 = vdwg.mxu0
    %731 = vrot.lane.b32.xlu0 %v176, 56
    %v732 = vpop.permute.xlu0 %731
    %733 = vrot.lane.b32.xlu0 %v181, 56
    %v734 = vpop.permute.xlu0 %733
    %v738 = vsel %vm555, %v598, 0
    %v741 = vsel %vm555, %v599, 0
    %743 = vmatprep.subr.mxu0 0.0
    %744 = vmatpush1.msra.mxu0 %v732
    %745 = vmatprep.subr.mxu0 0.0
    %746 = vmatpush1.msra.mxu0 %v734
    %747 = vmatprep.subr.mxu0 0.0
    %748 = vmatpush1.msra.mxu0 0.0
    %749 = vmatprep.subr.mxu0 0.0
    %750 = vmatpush1.msra.mxu0 0.0
    %751 = vmatprep.subr.mxu0 0.0
    %752 = vmatpush1.msra.mxu0 0.0
    %753 = vmatprep.subr.mxu0 0.0
    %754 = vmatpush1.msra.mxu0 0.0
    %755 = vmatprep.subr.mxu0 0.0
    %756 = vmatpush1.msra.mxu0 0.0
    %757 = vmatprep.subr.mxu0 0.0
    %758 = vmatpush1.msra.mxu0 0.0
    %759 = vmatprep.subr.mxu0 0.0
    %760 = vmatpush1.msra.mxu0 0.0
    %761 = vmatprep.subr.mxu0 0.0
    %762 = vmatpush1.msra.mxu0 0.0
    %763 = vmatprep.subr.mxu0 0.0
    %764 = vmatpush1.msra.mxu0 0.0
    %765 = vmatprep.subr.mxu0 0.0
    %766 = vmatpush1.msra.mxu0 0.0
    %767 = vmatprep.subr.mxu0 0.0
    %768 = vmatpush1.msra.mxu0 0.0
    %769 = vmatprep.subr.mxu0 0.0
    %770 = vmatpush1.msra.mxu0 0.0
    %771 = vmatprep.subr.mxu0 0.0
    %772 = vmatpush1.msra.mxu0 0.0
    %773 = vmatprep.subr.mxu0 0.0
    %774 = vmatpush1.msra.mxu0 0.0
    %775 = vmatprep.subr.mxu0 0.0
    %776 = vmatpush1.msra.mxu0 0.0
    %777 = vmatprep.subr.mxu0 0.0
    %778 = vmatpush1.msra.mxu0 0.0
    %779 = vmatprep.subr.mxu0 0.0
    %780 = vmatpush1.msra.mxu0 0.0
    %781 = vmatprep.subr.mxu0 0.0
    %782 = vmatpush1.msra.mxu0 0.0
    %783 = vmatprep.subr.mxu0 0.0
    %784 = vmatpush1.msra.mxu0 0.0
    %785 = vmatprep.subr.mxu0 0.0
    %786 = vmatpush1.msra.mxu0 0.0
    %787 = vmatprep.subr.mxu0 0.0
    %788 = vmatpush1.msra.mxu0 0.0
    %789 = vmatprep.subr.mxu0 0.0
    %790 = vmatpush1.msra.mxu0 0.0
    %791 = vmatprep.subr.mxu0 0.0
    %792 = vmatpush1.msra.mxu0 0.0
    %793 = vmatprep.subr.mxu0 0.0
    %794 = vmatpush1.msra.mxu0 0.0
    %795 = vmatprep.subr.mxu0 0.0
    %796 = vmatpush1.msra.mxu0 0.0
    %797 = vmatprep.subr.mxu0 0.0
    %798 = vmatpush1.msra.mxu0 0.0
    %799 = vmatprep.subr.mxu0 0.0
    %800 = vmatpush1.msra.mxu0 0.0
    %801 = vmatprep.subr.mxu0 0.0
    %802 = vmatpush1.msra.mxu0 0.0
    %803 = vmatprep.subr.mxu0 0.0
    %804 = vmatpush1.msra.mxu0 0.0
    %805 = vmatprep.subr.mxu0 0.0
    %806 = vmatpush1.msra.mxu0 0.0
    %807 = vmatprep.mubr.f32.mxu0 0.0
    %808 = vmatmul.mubr.f32.gmra.mrb[0].mxu0 %v738
    %v809 = vpop.f32.mrb[0].mxu0
    %v810 = vadd.f32 0.0, %v809
    %v811 = vpop.f32.mrb[0].mxu0
    %812 = vmatprep.mubr.f32.mxu0 0.0
    %813 = vmatmul.mubr.f32.gmra.mrb[0].mxu0 %v741
    %v814 = vpop.f32.mrb[0].mxu0
    %v815 = vadd.f32 0.0, %v814
    %v816 = vpop.f32.mrb[0].mxu0
    %817 = vdwg.mxu0
    %818 = vrot.lane.b32.xlu0 %v176, 48
    %v819 = vpop.permute.xlu0 %818
    %820 = vrot.lane.b32.xlu0 %v181, 48
    %v821 = vpop.permute.xlu0 %820
    %v825 = vsel %vm555, %v620, 0
    %v828 = vsel %vm555, %v621, 0
    %830 = vmatprep.subr.mxu0 0.0
    %831 = vmatpush1.msra.mxu0 %v819
    %832 = vmatprep.subr.mxu0 0.0
    %833 = vmatpush1.msra.mxu0 %v821
    %834 = vmatprep.subr.mxu0 0.0
    %835 = vmatpush1.msra.mxu0 0.0
    %836 = vmatprep.subr.mxu0 0.0
    %837 = vmatpush1.msra.mxu0 0.0
    %838 = vmatprep.subr.mxu0 0.0
    %839 = vmatpush1.msra.mxu0 0.0
    %840 = vmatprep.subr.mxu0 0.0
    %841 = vmatpush1.msra.mxu0 0.0
    %842 = vmatprep.subr.mxu0 0.0
    %843 = vmatpush1.msra.mxu0 0.0
    %844 = vmatprep.subr.mxu0 0.0
    %845 = vmatpush1.msra.mxu0 0.0
    %846 = vmatprep.subr.mxu0 0.0
    %847 = vmatpush1.msra.mxu0 0.0
    %848 = vmatprep.subr.mxu0 0.0
    %849 = vmatpush1.msra.mxu0 0.0
    %850 = vmatprep.subr.mxu0 0.0
    %851 = vmatpush1.msra.mxu0 0.0
    %852 = vmatprep.subr.mxu0 0.0
    %853 = vmatpush1.msra.mxu0 0.0
    %854 = vmatprep.subr.mxu0 0.0
    %855 = vmatpush1.msra.mxu0 0.0
    %856 = vmatprep.subr.mxu0 0.0
    %857 = vmatpush1.msra.mxu0 0.0
    %858 = vmatprep.subr.mxu0 0.0
    %859 = vmatpush1.msra.mxu0 0.0
    %860 = vmatprep.subr.mxu0 0.0
    %861 = vmatpush1.msra.mxu0 0.0
    %862 = vmatprep.subr.mxu0 0.0
    %863 = vmatpush1.msra.mxu0 0.0
    %864 = vmatprep.subr.mxu0 0.0
    %865 = vmatpush1.msra.mxu0 0.0
    %866 = vmatprep.subr.mxu0 0.0
    %867 = vmatpush1.msra.mxu0 0.0
    %868 = vmatprep.subr.mxu0 0.0
    %869 = vmatpush1.msra.mxu0 0.0
    %870 = vmatprep.subr.mxu0 0.0
    %871 = vmatpush1.msra.mxu0 0.0
    %872 = vmatprep.subr.mxu0 0.0
    %873 = vmatpush1.msra.mxu0 0.0
    %874 = vmatprep.subr.mxu0 0.0
    %875 = vmatpush1.msra.mxu0 0.0
    %876 = vmatprep.subr.mxu0 0.0
    %877 = vmatpush1.msra.mxu0 0.0
    %878 = vmatprep.subr.mxu0 0.0
    %879 = vmatpush1.msra.mxu0 0.0
    %880 = vmatprep.subr.mxu0 0.0
    %881 = vmatpush1.msra.mxu0 0.0
    %882 = vmatprep.subr.mxu0 0.0
    %883 = vmatpush1.msra.mxu0 0.0
    %884 = vmatprep.subr.mxu0 0.0
    %885 = vmatpush1.msra.mxu0 0.0
    %886 = vmatprep.subr.mxu0 0.0
    %887 = vmatpush1.msra.mxu0 0.0
    %888 = vmatprep.subr.mxu0 0.0
    %889 = vmatpush1.msra.mxu0 0.0
    %890 = vmatprep.subr.mxu0 0.0
    %891 = vmatpush1.msra.mxu0 0.0
    %892 = vmatprep.subr.mxu0 0.0
    %893 = vmatpush1.msra.mxu0 0.0
    %894 = vmatprep.mubr.f32.mxu0 0.0
    %895 = vmatmul.mubr.f32.gmra.mrb[0].mxu0 %v825
    %v896 = vpop.f32.mrb[0].mxu0
    %v897 = vadd.f32 0.0, %v896
    %v898 = vpop.f32.mrb[0].mxu0
    %899 = vmatprep.mubr.f32.mxu0 0.0
    %900 = vmatmul.mubr.f32.gmra.mrb[0].mxu0 %v828
    %v901 = vpop.f32.mrb[0].mxu0
    %v902 = vadd.f32 0.0, %v901
    %v903 = vpop.f32.mrb[0].mxu0
    %904 = vdwg.mxu0
    %905 = vrot.lane.b32.xlu0 %v176, 40
    %v906 = vpop.permute.xlu0 %905
    %907 = vrot.lane.b32.xlu0 %v181, 40
    %v908 = vpop.permute.xlu0 %907
    %v912 = vsel %vm555, %v642, 0
    %v915 = vsel %vm555, %v643, 0
    %917 = vmatprep.subr.mxu0 0.0
    %918 = vmatpush1.msra.mxu0 %v906
    %919 = vmatprep.subr.mxu0 0.0
    %920 = vmatpush1.msra.mxu0 %v908
    %921 = vmatprep.subr.mxu0 0.0
    %922 = vmatpush1.msra.mxu0 0.0
    %923 = vmatprep.subr.mxu0 0.0
    %924 = vmatpush1.msra.mxu0 0.0
    %925 = vmatprep.subr.mxu0 0.0
    %926 = vmatpush1.msra.mxu0 0.0
    %927 = vmatprep.subr.mxu0 0.0
    %928 = vmatpush1.msra.mxu0 0.0
    %929 = vmatprep.subr.mxu0 0.0
    %930 = vmatpush1.msra.mxu0 0.0
    %931 = vmatprep.subr.mxu0 0.0
    %932 = vmatpush1.msra.mxu0 0.0
    %933 = vmatprep.subr.mxu0 0.0
    %934 = vmatpush1.msra.mxu0 0.0
    %935 = vmatprep.subr.mxu0 0.0
    %936 = vmatpush1.msra.mxu0 0.0
    %937 = vmatprep.subr.mxu0 0.0
    %938 = vmatpush1.msra.mxu0 0.0
    %939 = vmatprep.subr.mxu0 0.0
    %940 = vmatpush1.msra.mxu0 0.0
    %941 = vmatprep.subr.mxu0 0.0
    %942 = vmatpush1.msra.mxu0 0.0
    %943 = vmatprep.subr.mxu0 0.0
    %944 = vmatpush1.msra.mxu0 0.0
    %945 = vmatprep.subr.mxu0 0.0
    %946 = vmatpush1.msra.mxu0 0.0
    %947 = vmatprep.subr.mxu0 0.0
    %948 = vmatpush1.msra.mxu0 0.0
    %949 = vmatprep.subr.mxu0 0.0
    %950 = vmatpush1.msra.mxu0 0.0
    %951 = vmatprep.subr.mxu0 0.0
    %952 = vmatpush1.msra.mxu0 0.0
    %953 = vmatprep.subr.mxu0 0.0
    %954 = vmatpush1.msra.mxu0 0.0
    %955 = vmatprep.subr.mxu0 0.0
    %956 = vmatpush1.msra.mxu0 0.0
    %957 = vmatprep.subr.mxu0 0.0
    %958 = vmatpush1.msra.mxu0 0.0
    %959 = vmatprep.subr.mxu0 0.0
    %960 = vmatpush1.msra.mxu0 0.0
    %961 = vmatprep.subr.mxu0 0.0
    %962 = vmatpush1.msra.mxu0 0.0
    %963 = vmatprep.subr.mxu0 0.0
    %964 = vmatpush1.msra.mxu0 0.0
    %965 = vmatprep.subr.mxu0 0.0
    %966 = vmatpush1.msra.mxu0 0.0
    %967 = vmatprep.subr.mxu0 0.0
    %968 = vmatpush1.msra.mxu0 0.0
    %969 = vmatprep.subr.mxu0 0.0
    %970 = vmatpush1.msra.mxu0 0.0
    %971 = vmatprep.subr.mxu0 0.0
    %972 = vmatpush1.msra.mxu0 0.0
    %973 = vmatprep.subr.mxu0 0.0
    %974 = vmatpush1.msra.mxu0 0.0
    %975 = vmatprep.subr.mxu0 0.0
    %976 = vmatpush1.msra.mxu0 0.0
    %977 = vmatprep.subr.mxu0 0.0
    %978 = vmatpush1.msra.mxu0 0.0
    %979 = vmatprep.subr.mxu0 0.0
    %980 = vmatpush1.msra.mxu0 0.0
    %981 = vmatprep.mubr.f32.mxu0 0.0
    %982 = vmatmul.mubr.f32.gmra.mrb[0].mxu0 %v912
    %v983 = vpop.f32.mrb[0].mxu0
    %v984 = vadd.f32 0.0, %v983
    %v985 = vpop.f32.mrb[0].mxu0
    %986 = vmatprep.mubr.f32.mxu0 0.0
    %987 = vmatmul.mubr.f32.gmra.mrb[0].mxu0 %v915
    %v988 = vpop.f32.mrb[0].mxu0
    %v989 = vadd.f32 0.0, %v988
    %v990 = vpop.f32.mrb[0].mxu0
    %991 = vdwg.mxu0
    %994 = vrot.lane.b32.xlu0 %v810, 8
    %v995 = vpop.permute.xlu0 %994
    %996 = vrot.lane.b32.xlu0 %v815, 8
    %v997 = vpop.permute.xlu0 %996
    %1002 = vrot.lane.b32.xlu0 %v897, 16
    %v1003 = vpop.permute.xlu0 %1002
    %1004 = vrot.lane.b32.xlu0 %v902, 16
    %v1005 = vpop.permute.xlu0 %1004
    %1010 = vrot.lane.b32.xlu0 %v984, 24
    %v1011 = vpop.permute.xlu0 %1010
    %1012 = vrot.lane.b32.xlu0 %v989, 24
    %v1013 = vpop.permute.xlu0 %1012
    %v1016 = vsel %vm198, %v723, %v995
    %v1017 = vsel %vm198, %v728, %v997
    %v1018 = vsel %vm555, %v1016, %v1003
    %v1019 = vsel %vm555, %v1017, %v1005
    %vm1020 = vcmask 195584
    %v1021 = vsel %vm1020, %v1018, %v1011
    %v1022 = vsel %vm1020, %v1019, %v1013
    %1027 = vrot.lane.b32.xlu0 %v42, 32
    %v1028 = vpop.permute.xlu0 %1027
    %1029 = vrot.lane.b32.xlu0 %v43, 32
    %v1030 = vpop.permute.xlu0 %1029
    %1031 = vrot.lane.b32.xlu0 %v44, 32
    %v1032 = vpop.permute.xlu0 %1031
    %1033 = vrot.lane.b32.xlu0 %v45, 32
    %v1034 = vpop.permute.xlu0 %1033
    %1040 = vrot.lane.b32.xlu0 %v102, 32
    %v1041 = vpop.permute.xlu0 %1040
    %v1044 = vsel %vm59, %v1021, 0
    %v1047 = vsel %vm59, %v1022, 0
    %1049 = vmatprep.subr.mxu0 0.0
    %1050 = vmatpush1.msra.mxu0 %v1028
    %1051 = vmatprep.subr.mxu0 0.0
    %1052 = vmatpush1.msra.mxu0 %v1030
    %1053 = vmatprep.subr.mxu0 0.0
    %1054 = vmatpush1.msra.mxu0 %v1032
    %1055 = vmatprep.subr.mxu0 0.0
    %1056 = vmatpush1.msra.mxu0 %v1034
    %1057 = vmatprep.subr.mxu0 0.0
    %1058 = vmatpush1.msra.mxu0 0.0
    %1059 = vmatprep.subr.mxu0 0.0
    %1060 = vmatpush1.msra.mxu0 0.0
    %1061 = vmatprep.subr.mxu0 0.0
    %1062 = vmatpush1.msra.mxu0 0.0
    %1063 = vmatprep.subr.mxu0 0.0
    %1064 = vmatpush1.msra.mxu0 0.0
    %1065 = vmatprep.subr.mxu0 0.0
    %1066 = vmatpush1.msra.mxu0 0.0
    %1067 = vmatprep.subr.mxu0 0.0
    %1068 = vmatpush1.msra.mxu0 0.0
    %1069 = vmatprep.subr.mxu0 0.0
    %1070 = vmatpush1.msra.mxu0 0.0
    %1071 = vmatprep.subr.mxu0 0.0
    %1072 = vmatpush1.msra.mxu0 0.0
    %1073 = vmatprep.subr.mxu0 0.0
    %1074 = vmatpush1.msra.mxu0 0.0
    %1075 = vmatprep.subr.mxu0 0.0
    %1076 = vmatpush1.msra.mxu0 0.0
    %1077 = vmatprep.subr.mxu0 0.0
    %1078 = vmatpush1.msra.mxu0 0.0
    %1079 = vmatprep.subr.mxu0 0.0
    %1080 = vmatpush1.msra.mxu0 0.0
    %1081 = vmatprep.subr.mxu0 0.0
    %1082 = vmatpush1.msra.mxu0 0.0
    %1083 = vmatprep.subr.mxu0 0.0
    %1084 = vmatpush1.msra.mxu0 0.0
    %1085 = vmatprep.subr.mxu0 0.0
    %1086 = vmatpush1.msra.mxu0 0.0
    %1087 = vmatprep.subr.mxu0 0.0
    %1088 = vmatpush1.msra.mxu0 0.0
    %1089 = vmatprep.subr.mxu0 0.0
    %1090 = vmatpush1.msra.mxu0 0.0
    %1091 = vmatprep.subr.mxu0 0.0
    %1092 = vmatpush1.msra.mxu0 0.0
    %1093 = vmatprep.subr.mxu0 0.0
    %1094 = vmatpush1.msra.mxu0 0.0
    %1095 = vmatprep.subr.mxu0 0.0
    %1096 = vmatpush1.msra.mxu0 0.0
    %1097 = vmatprep.subr.mxu0 0.0
    %1098 = vmatpush1.msra.mxu0 0.0
    %1099 = vmatprep.subr.mxu0 0.0
    %1100 = vmatpush1.msra.mxu0 0.0
    %1101 = vmatprep.subr.mxu0 0.0
    %1102 = vmatpush1.msra.mxu0 0.0
    %1103 = vmatprep.subr.mxu0 0.0
    %1104 = vmatpush1.msra.mxu0 0.0
    %1105 = vmatprep.subr.mxu0 0.0
    %1106 = vmatpush1.msra.mxu0 0.0
    %1107 = vmatprep.subr.mxu0 0.0
    %1108 = vmatpush1.msra.mxu0 0.0
    %1109 = vmatprep.subr.mxu0 0.0
    %1110 = vmatpush1.msra.mxu0 0.0
    %1111 = vmatprep.subr.mxu0 0.0
    %1112 = vmatpush1.msra.mxu0 0.0
    %1113 = vmatprep.mubr.f32.mxu0 0.0
    %1114 = vmatmul.mubr.f32.gmra.mrb[0].mxu0 %v1044
    %v1115 = vpop.f32.mrb[0].mxu0
    %v1116 = vadd.f32 %v1041, %v1115
    %v1117 = vpop.f32.mrb[0].mxu0
    %1118 = vmatprep.mubr.f32.mxu0 0.0
    %1119 = vmatmul.mubr.f32.gmra.mrb[0].mxu0 %v1047
    %v1120 = vpop.f32.mrb[0].mxu0
    %v1121 = vadd.f32 %v1041, %v1120
    %v1122 = vpop.f32.mrb[0].mxu0
    %1123 = vdwg.mxu0
    %v1124 = vadd.f32 %v1116, %v40
    %v1125 = vadd.f32 %v1121, %v41
    %v1126 = vsel %vm59, %v1124, 0.0
    %1127 = vadd.xlane.f32.xlu0 %v1126
    %v1128 = vpop.xlane.xlu0 %1127
    %v1129 = vsel %vm59, %v1125, 0.0
    %1130 = vadd.xlane.f32.xlu0 %v1129
    %v1131 = vpop.xlane.xlu0 %1130
    %v1132 = vmul.f32 %v1128, %v66
    %v1133 = vmul.f32 %v1131, %v66
    %v1134 = vsub.f32 %v1124, %v1132
    %v1135 = vsub.f32 %v1125, %v1133
    %v1136 = vmul.f32 %v1134, %v1134
    %v1137 = vmul.f32 %v1135, %v1135
    %v1138 = vsel %vm59, %v1136, 0.0
    %1139 = vadd.xlane.f32.xlu0 %v1138
    %v1140 = vpop.xlane.xlu0 %1139
    %v1141 = vsel %vm59, %v1137, 0.0
    %1142 = vadd.xlane.f32.xlu0 %v1141
    %v1143 = vpop.xlane.xlu0 %1142
    %v1144 = vmul.f32 %v1140, %v66
    %v1145 = vmul.f32 %v1143, %v66
    %v1146 = vadd.f32 %v1144, 1e-05
    %v1147 = vadd.f32 %v1145, 1e-05
    %v1148 = vrsqrt.pop %v1146
    %v1149 = vrsqrt.pop %v1147
    %v1150 = vmul.f32 %v1134, %v1148
    %v1151 = vmul.f32 %v1135, %v1149
    %1152 = vrot.lane.b32.xlu0 %v90, 64
    %v1153 = vpop.permute.xlu0 %1152
    %v1155 = vmul.f32 %v1150, %v1153
    %v1156 = vmul.f32 %v1151, %v1153
    %1157 = vrot.lane.b32.xlu0 %v90, 32
    %v1158 = vpop.permute.xlu0 %1157
    %v1160 = vadd.f32 %v1155, %v1158
    %v1161 = vadd.f32 %v1156, %v1158
    %v1162 = vlaneseq
    %v1163 = vshrl.u32 %v1162, 7
    %v1164 = vsub.s32 2, %v1163
    %v1165 = vrot.slane %v58, %v1164
    %v1167 = vsel %vm59, %v1160, 0
    %v1170 = vsel %vm59, %v1161, 0
    %1172 = vmatprep.subr.mxu0 0.0
    %1173 = vmatpush1.msra.mxu0 %v46
    %1174 = vmatprep.subr.mxu0 0.0
    %1175 = vmatpush1.msra.mxu0 %v47
    %1176 = vmatprep.subr.mxu0 0.0
    %1177 = vmatpush1.msra.mxu0 %v48
    %1178 = vmatprep.subr.mxu0 0.0
    %1179 = vmatpush1.msra.mxu0 %v49
    %1180 = vmatprep.subr.mxu0 0.0
    %1181 = vmatpush1.msra.mxu0 0.0
    %1182 = vmatprep.subr.mxu0 0.0
    %1183 = vmatpush1.msra.mxu0 0.0
    %1184 = vmatprep.subr.mxu0 0.0
    %1185 = vmatpush1.msra.mxu0 0.0
    %1186 = vmatprep.subr.mxu0 0.0
    %1187 = vmatpush1.msra.mxu0 0.0
    %1188 = vmatprep.subr.mxu0 0.0
    %1189 = vmatpush1.msra.mxu0 0.0
    %1190 = vmatprep.subr.mxu0 0.0
    %1191 = vmatpush1.msra.mxu0 0.0
    %1192 = vmatprep.subr.mxu0 0.0
    %1193 = vmatpush1.msra.mxu0 0.0
    %1194 = vmatprep.subr.mxu0 0.0
    %1195 = vmatpush1.msra.mxu0 0.0
    %1196 = vmatprep.subr.mxu0 0.0
    %1197 = vmatpush1.msra.mxu0 0.0
    %1198 = vmatprep.subr.mxu0 0.0
    %1199 = vmatpush1.msra.mxu0 0.0
    %1200 = vmatprep.subr.mxu0 0.0
    %1201 = vmatpush1.msra.mxu0 0.0
    %1202 = vmatprep.subr.mxu0 0.0
    %1203 = vmatpush1.msra.mxu0 0.0
    %1204 = vmatprep.subr.mxu0 0.0
    %1205 = vmatpush1.msra.mxu0 0.0
    %1206 = vmatprep.subr.mxu0 0.0
    %1207 = vmatpush1.msra.mxu0 0.0
    %1208 = vmatprep.subr.mxu0 0.0
    %1209 = vmatpush1.msra.mxu0 0.0
    %1210 = vmatprep.subr.mxu0 0.0
    %1211 = vmatpush1.msra.mxu0 0.0
    %1212 = vmatprep.subr.mxu0 0.0
    %1213 = vmatpush1.msra.mxu0 0.0
    %1214 = vmatprep.subr.mxu0 0.0
    %1215 = vmatpush1.msra.mxu0 0.0
    %1216 = vmatprep.subr.mxu0 0.0
    %1217 = vmatpush1.msra.mxu0 0.0
    %1218 = vmatprep.subr.mxu0 0.0
    %1219 = vmatpush1.msra.mxu0 0.0
    %1220 = vmatprep.subr.mxu0 0.0
    %1221 = vmatpush1.msra.mxu0 0.0
    %1222 = vmatprep.subr.mxu0 0.0
    %1223 = vmatpush1.msra.mxu0 0.0
    %1224 = vmatprep.subr.mxu0 0.0
    %1225 = vmatpush1.msra.mxu0 0.0
    %1226 = vmatprep.subr.mxu0 0.0
    %1227 = vmatpush1.msra.mxu0 0.0
    %1228 = vmatprep.subr.mxu0 0.0
    %1229 = vmatpush1.msra.mxu0 0.0
    %1230 = vmatprep.subr.mxu0 0.0
    %1231 = vmatpush1.msra.mxu0 0.0
    %1232 = vmatprep.subr.mxu0 0.0
    %1233 = vmatpush1.msra.mxu0 0.0
    %1234 = vmatprep.subr.mxu0 0.0
    %1235 = vmatpush1.msra.mxu0 0.0
    %1236 = vmatprep.mubr.f32.mxu0 0.0
    %1237 = vmatmul.mubr.f32.gmra.mrb[0].mxu0 %v1167
    %v1238 = vpop.f32.mrb[0].mxu0
    %v1239 = vadd.f32 %v1165, %v1238
    %v1240 = vpop.f32.mrb[0].mxu0
    %1241 = vmatprep.mubr.f32.mxu0 0.0
    %1242 = vmatmul.mubr.f32.gmra.mrb[0].mxu0 %v1170
    %v1243 = vpop.f32.mrb[0].mxu0
    %v1244 = vadd.f32 %v1165, %v1243
    %v1245 = vpop.f32.mrb[0].mxu0
    %1246 = vdwg.mxu0
    %v1247 = vmul.f32 %v1239, 0.5
    %v1248 = vmul.f32 %v1244, 0.5
    %v1249 = vmul.f32 %v1239, 0.70710677
    %v1250 = vmul.f32 %v1244, 0.70710677
    %v1251 = verf.f32.pop %v1249
    %v1252 = verf.f32.pop %v1250
    %v1253 = vadd.f32 %v1251, 1.0
    %v1254 = vadd.f32 %v1252, 1.0
    %v1255 = vmul.f32 %v1247, %v1253
    %v1256 = vmul.f32 %v1248, %v1254
    %1258 = vrot.lane.b32.xlu0 %v1165, 64
    %v1259 = vpop.permute.xlu0 %1258
    %vm1261 = vcmask 523264
    %v1263 = vsel %vm1261, %v1255, 0
    %v1266 = vsel %vm1261, %v1256, 0
    %1268 = vmatprep.subr.mxu0 0.0
    %1269 = vmatpush1.msra.mxu0 %v50
    %1270 = vmatprep.subr.mxu0 0.0
    %1271 = vmatpush1.msra.mxu0 %v51
    %1272 = vmatprep.subr.mxu0 0.0
    %1273 = vmatpush1.msra.mxu0 %v52
    %1274 = vmatprep.subr.mxu0 0.0
    %1275 = vmatpush1.msra.mxu0 %v53
    %1276 = vmatprep.subr.mxu0 0.0
    %1277 = vmatpush1.msra.mxu0 %v54
    %1278 = vmatprep.subr.mxu0 0.0
    %1279 = vmatpush1.msra.mxu0 %v55
    %1280 = vmatprep.subr.mxu0 0.0
    %1281 = vmatpush1.msra.mxu0 %v56
    %1282 = vmatprep.subr.mxu0 0.0
    %1283 = vmatpush1.msra.mxu0 %v57
    %1284 = vmatprep.subr.mxu0 0.0
    %1285 = vmatpush1.msra.mxu0 0.0
    %1286 = vmatprep.subr.mxu0 0.0
    %1287 = vmatpush1.msra.mxu0 0.0
    %1288 = vmatprep.subr.mxu0 0.0
    %1289 = vmatpush1.msra.mxu0 0.0
    %1290 = vmatprep.subr.mxu0 0.0
    %1291 = vmatpush1.msra.mxu0 0.0
    %1292 = vmatprep.subr.mxu0 0.0
    %1293 = vmatpush1.msra.mxu0 0.0
    %1294 = vmatprep.subr.mxu0 0.0
    %1295 = vmatpush1.msra.mxu0 0.0
    %1296 = vmatprep.subr.mxu0 0.0
    %1297 = vmatpush1.msra.mxu0 0.0
    %1298 = vmatprep.subr.mxu0 0.0
    %1299 = vmatpush1.msra.mxu0 0.0
    %1300 = vmatprep.subr.mxu0 0.0
    %1301 = vmatpush1.msra.mxu0 0.0
    %1302 = vmatprep.subr.mxu0 0.0
    %1303 = vmatpush1.msra.mxu0 0.0
    %1304 = vmatprep.subr.mxu0 0.0
    %1305 = vmatpush1.msra.mxu0 0.0
    %1306 = vmatprep.subr.mxu0 0.0
    %1307 = vmatpush1.msra.mxu0 0.0
    %1308 = vmatprep.subr.mxu0 0.0
    %1309 = vmatpush1.msra.mxu0 0.0
    %1310 = vmatprep.subr.mxu0 0.0
    %1311 = vmatpush1.msra.mxu0 0.0
    %1312 = vmatprep.subr.mxu0 0.0
    %1313 = vmatpush1.msra.mxu0 0.0
    %1314 = vmatprep.subr.mxu0 0.0
    %1315 = vmatpush1.msra.mxu0 0.0
    %1316 = vmatprep.subr.mxu0 0.0
    %1317 = vmatpush1.msra.mxu0 0.0
    %1318 = vmatprep.subr.mxu0 0.0
    %1319 = vmatpush1.msra.mxu0 0.0
    %1320 = vmatprep.subr.mxu0 0.0
    %1321 = vmatpush1.msra.mxu0 0.0
    %1322 = vmatprep.subr.mxu0 0.0
    %1323 = vmatpush1.msra.mxu0 0.0
    %1324 = vmatprep.subr.mxu0 0.0
    %1325 = vmatpush1.msra.mxu0 0.0
    %1326 = vmatprep.subr.mxu0 0.0
    %1327 = vmatpush1.msra.mxu0 0.0
    %1328 = vmatprep.subr.mxu0 0.0
    %1329 = vmatpush1.msra.mxu0 0.0
    %1330 = vmatprep.subr.mxu0 0.0
    %1331 = vmatpush1.msra.mxu0 0.0
    %1332 = vmatprep.mubr.f32.mxu0 0.0
    %1333 = vmatmul.mubr.f32.gmra.mrb[0].mxu0 %v1263
    %v1334 = vpop.f32.mrb[0].mxu0
    %v1335 = vadd.f32 %v1259, %v1334
    %v1336 = vpop.f32.mrb[0].mxu0
    %1337 = vmatprep.mubr.f32.mxu0 0.0
    %1338 = vmatmul.mubr.f32.gmra.mrb[0].mxu0 %v1266
    %v1339 = vpop.f32.mrb[0].mxu0
    %v1340 = vadd.f32 %v1259, %v1339
    %v1341 = vpop.f32.mrb[0].mxu0
    %1342 = vdwg.mxu0
    %v1343 = vadd.f32 %v1335, %v1124
    %v1344 = vadd.f32 %v1340, %v1125
    %1345 = vst.msk [vmem:[#allocation7] sm:$0xff] %vm59, %v1343
    %1346 = vst.msk [vmem:[#allocation7 + $0x8] sm:$0xff] %vm59, %v1344
    // Predicated region
    $region18: #{tpu_custom_call.1} parent=1 // pred_check
      _
    $region19: #{tpu_custom_call.1} parent=1 // pred_check_branch
      %1348 = sbr.rel (0) target = $region21
    $region20: #{tpu_custom_call.1} parent=1 // pred_region
      %s1350 = ssub.s32 256, 256
      %1351 = vsyncadd [#allocation4], %s1350
      %s1352 = sshll.u32 [#allocation7], 4
      %s1353 = int_to_ptr.vmem [resolvable:$true] %s1352
      %1358 = dma.vmem_to_hbm [thread:$0]  %s1353, 256, %s2, [#allocation4], 128, 128, 8
    $region21: #{tpu_custom_call.1} parent=1 // pred_fallthru
      _
    // Predicated region
    $region22: #{tpu_custom_call.1} parent=1 // pred_check
      _
    $region23: #{tpu_custom_call.1} parent=1 // pred_check_branch
      %1360 = sbr.rel (0) target = $region25
    $region24: #{tpu_custom_call.1} parent=1 // pred_region
      %1361 = dma.done [#allocation4], 256
    $region25: #{tpu_custom_call.1} parent=1 // pred_fallthru
      _
    %1362 = vsyncpa [#allocation3], 1
    %1363 = vsyncpa [#allocation6], 1
    %1364 = vsyncpa [#allocation4], 1

</llo_original>
